<compile_context>
chip_gen: v6e
topology: v6e:2x2x1
jax: 0.10.0
libtpu: 0.0.40
codegen_flags: <defaults>
</compile_context>

<pallas_src>
import functools

import jax
import jax.numpy as jnp
from jax.experimental import pallas as pl
from jax.experimental.pallas import tpu as pltpu

EPS = 1e-5
LANE = 128


def _round_up(x, m):
    return (x + m - 1) // m * m


def _prelu_act_dtype():
    """bf16 elementwise only on chips with a bf16 VPU (v6e/v7x); f32 on v5e."""
    try:
        kind = jax.devices()[0].device_kind.lower()
    except Exception:
        return jnp.float32
    return jnp.bfloat16 if ("v6" in kind or "v7" in kind) else jnp.float32


def _tconv_stack_kernel(depth, Lt, Hp, L_real, c_real, act_dtype,
                        alpha_ref,              # SMEM (D,)                PReLU slopes
                        x_ref,                  # VMEM (1, Lt, Cp) f32     center tile
                        lh_ref, rh_ref,         # VMEM (1, 1, Hp, Cp) f32  halo slabs
                        w1_ref, b1_ref,         # (D, Cp, Cp) bf16, (D, 1, Cp) f32  pwConv1
                        beog_ref,               # (D, 1, Cp) f32           beta / gamma
                        wd_ref, bd_ref,         # (D, 3, Cp) f32 (gamma folded), (D, 1, Cp) f32
                        w2_ref, b2_ref,         # (D, Cp, Cp) bf16, (D, 1, Cp) f32  pwConv2
                        o_ref):                 # VMEM (1, Lt, Cp) f32
    # NOTE: at Cp=128 this body is VPU-bound; the two 128-K MXU dots per block
    # are cheap relative to the elementwise chain.
    W = Lt + 2 * Hp
    inv_c = 1.0 / c_real

    # Global time index of each window row (column vector — 128x cheaper masks).
    t0 = pl.program_id(1) * Lt - Hp
    row_g = t0 + jax.lax.broadcasted_iota(jnp.int32, (W, 1), 0)

    # Assemble the halo'd window.  Halo rows outside [0, L_real) are zero by
    # construction; out-of-range contributions are additionally masked below.
    h = jnp.concatenate([lh_ref[0, 0], x_ref[0], rh_ref[0, 0]], axis=0)   # (W, Cp) f32

    for i in range(depth):
        d = 1 << i                                  # dilation of block i
        a = alpha_ref[i]                            # PReLU slope (one nn.PReLU per block,
                                                    # reused for both activations)

        # --- pwConv1: bf16 MXU matmul, f32 accumulation ---
        out = jnp.dot(h.astype(jnp.bfloat16), w1_ref[i],
                      preferred_element_type=jnp.float32) + b1_ref[i]
        out = jnp.where(out >= 0, out, a * out)     # PReLU (f32 — feeds LN stats)

        # --- GLayerNorm over the c_real true channels (single pass) ---
        # Padded lanes of `out` are exactly 0 (w1/b1 padded columns are 0), so
        # plain lane sums divided by c_real give the unpadded statistics.
        mean = jnp.sum(out, axis=-1, keepdims=True) * inv_c
        msq = jnp.sum(out * out, axis=-1, keepdims=True) * inv_c
        var = jnp.maximum(msq - mean * mean, 0.0)
        # gamma is folded into the depthwise taps; beta/gamma is added here.
        z = (out - mean) * jax.lax.rsqrt(var + EPS) + beog_ref[i]

        # --- Depthwise Conv1d(kernel=3, dilation=d, padding=d) along time ---
        # Sublane rolls (XLU, idle slot) + global-index masks recreate the
        # zero padding at the true sequence edges; wrapped rows only land in
        # the halo margin (Hp >= 2^depth - 1) and are never read back.
        wd = wd_ref[i]                              # (3, Cp), gamma pre-folded
        left = jnp.where(row_g >= d, pltpu.roll(z, d, axis=0), 0.0)           # z[t - d]
        right = jnp.where(row_g < L_real - d, pltpu.roll(z, W - d, axis=0), 0.0)  # z[t + d]
        out = left * wd[0:1, :] + z * wd[1:2, :] + right * wd[2:3, :] + bd_ref[i]

        # --- PReLU #2 in act dtype (bf16 on v6e/v7x) — cast needed for MXU anyway ---
        out = out.astype(act_dtype)
        out = jnp.where(out >= 0, out, a.astype(act_dtype) * out)

        # --- pwConv2 + residual (residual stream stays f32) ---
        out = jnp.dot(out.astype(jnp.bfloat16), w2_ref[i],
                      preferred_element_type=jnp.float32) + b2_ref[i]
        h = h + out

    o_ref[0] = h[Hp:Hp + Lt]                        # write only the exact center rows


def tas_encoder_pallas(x_ncl, params, depth, lt_target=1024):
    """x_ncl: (B, in_channel, L) float32 (PyTorch Conv1d layout). Returns (B, out_channel, L)."""
    B, Cin, L = x_ncl.shape
    C = params["wc"].shape[1]
    assert depth >= 1 and 2 ** (depth - 1) < L, "largest dilation must be < sequence length"
    assert lt_target % 8 == 0
    Cp = max(LANE, _round_up(C, LANE))                      # lane-dense channel dim
    pc = Cp - C
    act_dtype = _prelu_act_dtype()

    # ---- time tiling: Lt rows per grid step, halo Hp per side ----
    Lt = L if L <= lt_target else lt_target
    T = -(-L // Lt)
    Lp = T * Lt
    H = (1 << depth) - 1                                    # receptive-field halo per side
    Hp = _round_up(H, 8)                                    # sublane-aligned halo

    # ---- Encoder stem in plain JAX (lane-sparse Cin, negligible FLOPs) ----
    # wc/bc padded to Cp -> stem writes a lane-dense (B, L, Cp) slab directly.
    wc = jnp.pad(params["wc"].astype(jnp.float32), ((0, 0), (0, pc)))
    bc = jnp.pad(params["bc"].astype(jnp.float32), ((0, 0), (0, pc)))
    x = jnp.transpose(x_ncl, (0, 2, 1)).astype(jnp.float32)            # (B, L, Cin)
    mean = jnp.mean(x, -1, keepdims=True)
    var = jnp.mean((x - mean) ** 2, -1, keepdims=True)
    x = (x - mean) * jax.lax.rsqrt(var + EPS) * params["g0"] + params["b0"]
    h0 = jnp.einsum("bli,io->blo", x, wc) + bc                         # (B, L, Cp); pads == 0
    if Lp != L:
        h0 = jnp.pad(h0, ((0, 0), (0, Lp - L), (0, 0)))                # pad time to T*Lt

    # ---- halo slabs (B, T, Hp, Cp): zeros outside [0, Lp) (small gathers) ----
    def _halo(starts):
        idx = starts[:, None] + jnp.arange(Hp)[None, :]                # (T, Hp)
        valid = (idx >= 0) & (idx < Lp)
        g = jnp.take(h0, jnp.clip(idx, 0, Lp - 1), axis=1)             # (B, T, Hp, Cp)
        return jnp.where(valid[None, :, :, None], g, 0.0)

    lhalo = _halo(jnp.arange(T) * Lt - Hp)
    rhalo = _halo(jnp.arange(T) * Lt + Lt)

    # ---- per-block params: fold gamma into the depthwise taps, pad to Cp ----
    # NOTE: depthwise taps are stored as (3, C); a PyTorch dwConv.weight of
    # shape (C, 1, 3) must be transposed to this layout when exporting.
    g_blk = params["g"]
    wd = params["wd"] * g_blk                                          # gamma folded
    beog = params["be"] / g_blk                                        # assumes gamma != 0
    pad_c = lambda a: jnp.pad(a.astype(jnp.float32), ((0, 0), (0, 0), (0, pc)))
    w1 = jnp.pad(params["w1"], ((0, 0), (0, pc), (0, pc))).astype(jnp.bfloat16)
    w2 = jnp.pad(params["w2"], ((0, 0), (0, pc), (0, pc))).astype(jnp.bfloat16)
    wd = pad_c(wd)
    b1, beog, bd, b2 = pad_c(params["b1"]), pad_c(beog), pad_c(params["bd"]), pad_c(params["b2"])

    # ---- VMEM budget: resident weights once + double-buffered blocks + temps ----
    Wn = Lt + 2 * Hp
    weight_bytes = depth * (2 * Cp * Cp * 2 + 7 * Cp * 4)              # w1+w2 bf16, small f32 vecs
    block_bytes = 2 * (2 * Lt + 2 * Hp) * Cp * 4                       # 2x (in + out + halos)
    temp_bytes = 10 * Wn * Cp * 4                                      # unrolled-loop live temps
    est = weight_bytes + block_bytes + temp_bytes
    try:
        phys = getattr(pltpu.get_tpu_info(), "vmem_capacity_bytes", 128 * 2 ** 20)
    except Exception:
        phys = 128 * 2 ** 20
    vmem_limit = int(min(int(phys * 0.75),                             # headroom for Mosaic scratch
                         max(32 * 2 ** 20, int(1.3 * est))))

    cost = pl.CostEstimate(
        flops=int(B * T * Wn * depth * (4 * Cp * Cp + 32 * Cp)),
        transcendentals=int(B * T * Wn * depth),
        bytes_accessed=int(2 * B * Lp * Cp * 4 + B * T * 2 * Hp * Cp * 4 + weight_bytes),
    )

    kernel = functools.partial(_tconv_stack_kernel, depth, Lt, Hp, L, C, act_dtype)

    # Constant weights: untiled, whole array resident in VMEM for the entire
    # grid -> fetched once, not re-DMA'd / double-buffered per grid step.
    resident = pl.BlockSpec(memory_space=pltpu.MemorySpace.VMEM)

    grid_spec = pltpu.PrefetchScalarGridSpec(
        num_scalar_prefetch=0,
        grid=(B, T),
        in_specs=[
            pl.BlockSpec(memory_space=pltpu.MemorySpace.SMEM),          # alpha (scalars)
            pl.BlockSpec((1, Lt, Cp), lambda b, t: (b, t, 0)),          # center tile (pipelined)
            pl.BlockSpec((1, 1, Hp, Cp), lambda b, t: (b, t, 0, 0)),    # left halo
            pl.BlockSpec((1, 1, Hp, Cp), lambda b, t: (b, t, 0, 0)),    # right halo
            resident, resident, resident,                               # w1, b1, beog
            resident, resident, resident, resident,                     # wd, bd, w2, b2
        ],
        out_specs=pl.BlockSpec((1, Lt, Cp), lambda b, t: (b, t, 0)),
    )

    out_blc = pl.pallas_call(
        kernel,
        out_shape=jax.ShapeDtypeStruct((B, Lp, Cp), jnp.float32),
        grid_spec=grid_spec,
        compiler_params=pltpu.CompilerParams(
            dimension_semantics=("parallel", "parallel"),   # disjoint tiles -> megacore-friendly
            vmem_limit_bytes=vmem_limit,
        ),
        cost_estimate=cost,
    )(params["alpha"], h0, lhalo, rhalo, w1, b1, beog, wd, bd, w2, b2)

    # TODO(synk): if the downstream consumer accepts (B, L, C) / bf16, skip this
    # slice+transpose HBM pass (or emit a (Cp, Lt) transposed block in-kernel).
    return jnp.transpose(out_blc[:, :L, :C], (0, 2, 1))                # back to (B, C, L)


def tas_encoder_ref(x_ncl, params, depth):
    """Pure-JAX f32 reference mirroring the PyTorch forward (channels-first + transposes)."""
    B, Cin, L = x_ncl.shape

    def gln(v_ncl, gamma, beta):
        v = jnp.transpose(v_ncl, (0, 2, 1))                  # (B, L, C)
        mean = jnp.mean(v, -1, keepdims=True)
        var = jnp.mean((v - mean) ** 2, -1, keepdims=True)
        return (v - mean) / jnp.sqrt(var + EPS) * gamma + beta   # channels-last output

    def prelu(v, a):
        return jnp.where(v >= 0, v, a * v)

    x = gln(x_ncl, params["g0"], params["b0"])               # (B, L, Cin)
    x = jnp.transpose(x, (0, 2, 1))                          # (B, Cin, L)
    x = jnp.einsum("bil,io->bol", x, params["wc"]) + params["bc"].reshape(1, -1, 1)

    for i in range(depth):
        d = 2 ** i
        a = params["alpha"][i]
        out = jnp.einsum("bil,io->bol", x, params["w1"][i]) + params["b1"][i].reshape(1, -1, 1)
        out = prelu(out, a)
        out = gln(out, params["g"][i], params["be"][i])      # (B, L, C)
        out = jnp.transpose(out, (0, 2, 1))                  # (B, C, L)
        pad = jnp.pad(out, ((0, 0), (0, 0), (d, d)))
        wd = params["wd"][i]
        out = (pad[:, :, 0:L] * wd[0][None, :, None]
               + pad[:, :, d:L + d] * wd[1][None, :, None]
               + pad[:, :, 2 * d:2 * d + L] * wd[2][None, :, None]) + params["bd"][i].reshape(1, -1, 1)
        out = prelu(out, a)
        out = jnp.einsum("bil,io->bol", out, params["w2"][i]) + params["b2"][i].reshape(1, -1, 1)
        x = x + out
    return x                                                 # (B, C, L)


def init_params(key, in_channel, out_channel, depth):
    ks = jax.random.split(key, 12)
    nrm = lambda k, s, sc=0.1: sc * jax.random.normal(k, s, jnp.float32)
    return {
        # encoder GLayerNorm (affine, non-trivial to exercise the gamma fold)
        "g0": 1.0 + nrm(ks[8], (1, in_channel)),
        "b0": nrm(ks[9], (1, in_channel), 0.05),
        # encoder 1x1 conv (stored as (in, out))
        "wc": nrm(ks[0], (in_channel, out_channel)),
        "bc": nrm(ks[1], (1, out_channel), 0.05),
        # per-block params, stacked over depth
        "alpha": jnp.full((depth,), 0.25, jnp.float32),      # PReLU default init
        "w1": nrm(ks[2], (depth, out_channel, out_channel)),
        "b1": nrm(ks[3], (depth, 1, out_channel), 0.05),
        "g": 1.0 + nrm(ks[10], (depth, 1, out_channel)),     # gamma != 0
        "be": nrm(ks[11], (depth, 1, out_channel)),
        "wd": nrm(ks[4], (depth, 3, out_channel)),           # depthwise taps (k, C)
        "bd": nrm(ks[5], (depth, 1, out_channel), 0.05),
        "w2": nrm(ks[6], (depth, out_channel, out_channel)),
        "b2": nrm(ks[7], (depth, 1, out_channel), 0.05),
    }


if __name__ == "__main__":
    B, Cin, L = 2, 4, 16          # batch, in_channel, sequence length
    C, depth = 32, 2              # out_channel, depth

    key = jax.random.PRNGKey(0)
    k_x, k_p = jax.random.split(key)
    x = jax.random.normal(k_x, (B, Cin, L), jnp.float32)     # PyTorch Conv1d layout (B, C, L)
    params = init_params(k_p, Cin, C, depth)

    ref = jax.block_until_ready(tas_encoder_ref(x, params, depth))

    # Single time tile (L <= lt_target).
    out = jax.block_until_ready(tas_encoder_pallas(x, params, depth))
    assert out.shape == (B, C, L), out.shape
    err = float(jnp.max(jnp.abs(out - ref)))
    # bf16 MXU inputs (f32 accumulation) vs. a pure-f32 reference -> loose tolerance.
    assert jnp.allclose(out, ref, atol=2.5e-2, rtol=2.5e-2), err

    # Force the multi-tile + halo path (Lt=8, T=2) and re-check.
    out2 = jax.block_until_ready(tas_encoder_pallas(x, params, depth, lt_target=8))
    err2 = float(jnp.max(jnp.abs(out2 - ref)))
    assert jnp.allclose(out2, ref, atol=2.5e-2, rtol=2.5e-2), err2

    print("KERNEL_OK")
</pallas_src>

<mosaic_0001>
module attributes {stable_mosaic.version = 11 : i64} {
  func.func @_tconv_stack_kernel(%arg0: i32, %arg1: i32, %arg2: memref<2xf32, #tpu.memory_space<smem>>, %arg3: memref<1x16x128xf32, #tpu.memory_space<vmem>>, %arg4: memref<1x1x8x128xf32, #tpu.memory_space<vmem>>, %arg5: memref<1x1x8x128xf32, #tpu.memory_space<vmem>>, %arg6: memref<2x128x128xbf16, #tpu.memory_space<vmem>>, %arg7: memref<2x1x128xf32, #tpu.memory_space<vmem>>, %arg8: memref<2x1x128xf32, #tpu.memory_space<vmem>>, %arg9: memref<2x3x128xf32, #tpu.memory_space<vmem>>, %arg10: memref<2x1x128xf32, #tpu.memory_space<vmem>>, %arg11: memref<2x128x128xbf16, #tpu.memory_space<vmem>>, %arg12: memref<2x1x128xf32, #tpu.memory_space<vmem>>, %arg13: memref<1x16x128xf32, #tpu.memory_space<vmem>>) attributes {dimension_semantics = [#tpu.dimension_semantics<parallel>, #tpu.dimension_semantics<parallel>], iteration_bounds = array<i64: 2, 1>, scalar_prefetch = 0 : i64, scratch_operands = 0 : i64, tpu.core_type = #tpu.core_type<tc>, window_params = [{transform_indices = @transform_0, window_bounds = array<i64: 2>}, {transform_indices = @transform_1, window_bounds = array<i64: 1, 16, 128>}, {transform_indices = @transform_2, window_bounds = array<i64: 1, 1, 8, 128>}, {transform_indices = @transform_3, window_bounds = array<i64: 1, 1, 8, 128>}, {pipeline_mode = #tpu.pipeline_mode<synchronous>, transform_indices = @transform_4, window_bounds = array<i64: 2, 128, 128>}, {pipeline_mode = #tpu.pipeline_mode<synchronous>, transform_indices = @transform_5, window_bounds = array<i64: 2, 1, 128>}, {pipeline_mode = #tpu.pipeline_mode<synchronous>, transform_indices = @transform_6, window_bounds = array<i64: 2, 1, 128>}, {pipeline_mode = #tpu.pipeline_mode<synchronous>, transform_indices = @transform_7, window_bounds = array<i64: 2, 3, 128>}, {pipeline_mode = #tpu.pipeline_mode<synchronous>, transform_indices = @transform_8, window_bounds = array<i64: 2, 1, 128>}, {pipeline_mode = #tpu.pipeline_mode<synchronous>, transform_indices = @transform_9, window_bounds = array<i64: 2, 128, 128>}, {pipeline_mode = #tpu.pipeline_mode<synchronous>, transform_indices = @transform_10, window_bounds = array<i64: 2, 1, 128>}, {transform_indices = @transform_11, window_bounds = array<i64: 1, 16, 128>}]} {
    %c16_i32 = arith.constant 16 : i32
    %0 = arith.muli %arg1, %c16_i32 : i32
    %c8_i32 = arith.constant 8 : i32
    %1 = arith.subi %0, %c8_i32 : i32
    %2 = tpu.iota {dimensions = array<i32: 0>} : vector<32x1xi32>
    %3 = vector.broadcast %1 : i32 to vector<32x1xi32>
    %4 = arith.addi %3, %2 : vector<32x1xi32>
    %c0 = arith.constant 0 : index
    %c0_0 = arith.constant 0 : index
    %c0_1 = arith.constant 0 : index
    %c0_2 = arith.constant 0 : index
    %5 = vector.load %arg4[%c0, %c0_0, %c0_1, %c0_2] : memref<1x1x8x128xf32, #tpu.memory_space<vmem>>, vector<1x1x8x128xf32>
    %6 = vector.shape_cast %5 : vector<1x1x8x128xf32> to vector<8x128xf32>
    %c0_3 = arith.constant 0 : index
    %c0_4 = arith.constant 0 : index
    %c0_5 = arith.constant 0 : index
    %7 = vector.load %arg3[%c0_3, %c0_4, %c0_5] : memref<1x16x128xf32, #tpu.memory_space<vmem>>, vector<1x16x128xf32>
    %8 = vector.shape_cast %7 : vector<1x16x128xf32> to vector<16x128xf32>
    %c0_6 = arith.constant 0 : index
    %c0_7 = arith.constant 0 : index
    %c0_8 = arith.constant 0 : index
    %c0_9 = arith.constant 0 : index
    %9 = vector.load %arg5[%c0_6, %c0_7, %c0_8, %c0_9] : memref<1x1x8x128xf32, #tpu.memory_space<vmem>>, vector<1x1x8x128xf32>
    %10 = vector.shape_cast %9 : vector<1x1x8x128xf32> to vector<8x128xf32>
    %11 = tpu.concatenate %6, %8, %10 in 0 : vector<8x128xf32>, vector<16x128xf32>, vector<8x128xf32> -> vector<32x128xf32>
    %c0_10 = arith.constant 0 : index
    %12 = memref.load %arg2[%c0_10] : memref<2xf32, #tpu.memory_space<smem>>
    %13 = arith.truncf %11 : vector<32x128xf32> to vector<32x128xbf16>
    %c0_11 = arith.constant 0 : index
    %c0_12 = arith.constant 0 : index
    %c0_13 = arith.constant 0 : index
    %14 = vector.load %arg6[%c0_11, %c0_12, %c0_13] : memref<2x128x128xbf16, #tpu.memory_space<vmem>>, vector<1x128x128xbf16>
    %15 = vector.shape_cast %14 : vector<1x128x128xbf16> to vector<128x128xbf16>
    %cst = arith.constant dense<0.000000e+00> : vector<32x128xf32>
    %16 = tpu.matmul %13, %15, %cst {dimension_numbers = #tpu.dot_dimension_numbers<[1], [0], [0], [1], [0, 0, 1, 1], [], []>} : vector<32x128xbf16>, vector<128x128xbf16>, vector<32x128xf32> -> vector<32x128xf32>
    %c0_14 = arith.constant 0 : index
    %c0_15 = arith.constant 0 : index
    %c0_16 = arith.constant 0 : index
    %17 = vector.load %arg7[%c0_14, %c0_15, %c0_16] : memref<2x1x128xf32, #tpu.memory_space<vmem>>, vector<1x1x128xf32>
    %18 = vector.shape_cast %17 : vector<1x1x128xf32> to vector<1x128xf32>
    %19 = vector.broadcast %18 : vector<1x128xf32> to vector<32x128xf32>
    %20 = arith.addf %16, %19 : vector<32x128xf32>
    %cst_17 = arith.constant 0.000000e+00 : f32
    %21 = vector.broadcast %cst_17 : f32 to vector<32x128xf32>
    %22 = arith.cmpf oge, %20, %21 : vector<32x128xf32>
    %23 = vector.broadcast %12 : f32 to vector<32x128xf32>
    %24 = arith.mulf %23, %20 : vector<32x128xf32>
    %25 = arith.select %22, %20, %24 : vector<32x128xi1>, vector<32x128xf32>
    %cst_18 = arith.constant dense<0.000000e+00> : vector<32xf32>
    %26 = vector.multi_reduction <add>, %25, %cst_18 [1] : vector<32x128xf32> to vector<32xf32>
    %27 = vector.shape_cast %26 : vector<32xf32> to vector<32x1xf32>
    %cst_19 = arith.constant 3.125000e-02 : f32
    %28 = vector.broadcast %cst_19 : f32 to vector<32x1xf32>
    %29 = arith.mulf %27, %28 : vector<32x1xf32>
    %30 = arith.mulf %25, %25 : vector<32x128xf32>
    %cst_20 = arith.constant dense<0.000000e+00> : vector<32xf32>
    %31 = vector.multi_reduction <add>, %30, %cst_20 [1] : vector<32x128xf32> to vector<32xf32>
    %32 = vector.shape_cast %31 : vector<32xf32> to vector<32x1xf32>
    %cst_21 = arith.constant 3.125000e-02 : f32
    %33 = vector.broadcast %cst_21 : f32 to vector<32x1xf32>
    %34 = arith.mulf %32, %33 : vector<32x1xf32>
    %35 = arith.mulf %29, %29 : vector<32x1xf32>
    %36 = arith.subf %34, %35 : vector<32x1xf32>
    %cst_22 = arith.constant 0.000000e+00 : f32
    %37 = vector.broadcast %cst_22 : f32 to vector<32x1xf32>
    %38 = arith.maximumf %36, %37 : vector<32x1xf32>
    %39 = vector.broadcast %29 : vector<32x1xf32> to vector<32x128xf32>
    %40 = arith.subf %25, %39 : vector<32x128xf32>
    %cst_23 = arith.constant 9.99999974E-6 : f32
    %41 = vector.broadcast %cst_23 : f32 to vector<32x1xf32>
    %42 = arith.addf %38, %41 : vector<32x1xf32>
    %43 = math.rsqrt %42 : vector<32x1xf32>
    %44 = vector.broadcast %43 : vector<32x1xf32> to vector<32x128xf32>
    %45 = arith.mulf %40, %44 : vector<32x128xf32>
    %c0_24 = arith.constant 0 : index
    %c0_25 = arith.constant 0 : index
    %c0_26 = arith.constant 0 : index
    %46 = vector.load %arg8[%c0_24, %c0_25, %c0_26] : memref<2x1x128xf32, #tpu.memory_space<vmem>>, vector<1x1x128xf32>
    %47 = vector.shape_cast %46 : vector<1x1x128xf32> to vector<1x128xf32>
    %48 = vector.broadcast %47 : vector<1x128xf32> to vector<32x128xf32>
    %49 = arith.addf %45, %48 : vector<32x128xf32>
    %c0_27 = arith.constant 0 : index
    %c0_28 = arith.constant 0 : index
    %c0_29 = arith.constant 0 : index
    %50 = vector.load %arg9[%c0_27, %c0_28, %c0_29] : memref<2x3x128xf32, #tpu.memory_space<vmem>>, vector<1x3x128xf32>
    %51 = vector.shape_cast %50 : vector<1x3x128xf32> to vector<3x128xf32>
    %c1_i32 = arith.constant 1 : i32
    %52 = vector.broadcast %c1_i32 : i32 to vector<32x1xi32>
    %53 = arith.cmpi sge, %4, %52 : vector<32x1xi32>
    %c1_i32_30 = arith.constant 1 : i32
    %54 = tpu.dynamic_rotate %49 by %c1_i32_30 dim 0 : vector<32x128xf32>, i32 -> vector<32x128xf32>
    %cst_31 = arith.constant 0.000000e+00 : f32
    %55 = vector.shape_cast %53 : vector<32x1xi1> to vector<32x1xi1>
    %56 = vector.broadcast %55 : vector<32x1xi1> to vector<32x128xi1>
    %57 = vector.broadcast %cst_31 : f32 to vector<32x128xf32>
    %58 = arith.select %56, %54, %57 : vector<32x128xi1>, vector<32x128xf32>
    %c15_i32 = arith.constant 15 : i32
    %59 = vector.broadcast %c15_i32 : i32 to vector<32x1xi32>
    %60 = arith.cmpi slt, %4, %59 : vector<32x1xi32>
    %c31_i32 = arith.constant 31 : i32
    %61 = tpu.dynamic_rotate %49 by %c31_i32 dim 0 : vector<32x128xf32>, i32 -> vector<32x128xf32>
    %cst_32 = arith.constant 0.000000e+00 : f32
    %62 = vector.shape_cast %60 : vector<32x1xi1> to vector<32x1xi1>
    %63 = vector.broadcast %62 : vector<32x1xi1> to vector<32x128xi1>
    %64 = vector.broadcast %cst_32 : f32 to vector<32x128xf32>
    %65 = arith.select %63, %61, %64 : vector<32x128xi1>, vector<32x128xf32>
    %66 = vector.extract_strided_slice %51 {offsets = [0, 0], sizes = [1, 128], strides = [1, 1]} : vector<3x128xf32> to vector<1x128xf32>
    %67 = vector.broadcast %66 : vector<1x128xf32> to vector<32x128xf32>
    %68 = arith.mulf %58, %67 : vector<32x128xf32>
    %69 = vector.extract_strided_slice %51 {offsets = [1, 0], sizes = [1, 128], strides = [1, 1]} : vector<3x128xf32> to vector<1x128xf32>
    %70 = vector.broadcast %69 : vector<1x128xf32> to vector<32x128xf32>
    %71 = arith.mulf %49, %70 : vector<32x128xf32>
    %72 = arith.addf %68, %71 : vector<32x128xf32>
    %73 = vector.extract_strided_slice %51 {offsets = [2, 0], sizes = [1, 128], strides = [1, 1]} : vector<3x128xf32> to vector<1x128xf32>
    %74 = vector.broadcast %73 : vector<1x128xf32> to vector<32x128xf32>
    %75 = arith.mulf %65, %74 : vector<32x128xf32>
    %76 = arith.addf %72, %75 : vector<32x128xf32>
    %c0_33 = arith.constant 0 : index
    %c0_34 = arith.constant 0 : index
    %c0_35 = arith.constant 0 : index
    %77 = vector.load %arg10[%c0_33, %c0_34, %c0_35] : memref<2x1x128xf32, #tpu.memory_space<vmem>>, vector<1x1x128xf32>
    %78 = vector.shape_cast %77 : vector<1x1x128xf32> to vector<1x128xf32>
    %79 = vector.broadcast %78 : vector<1x128xf32> to vector<32x128xf32>
    %80 = arith.addf %76, %79 : vector<32x128xf32>
    %cst_36 = arith.constant 0.000000e+00 : f32
    %81 = vector.broadcast %cst_36 : f32 to vector<32x128xf32>
    %82 = arith.cmpf oge, %80, %81 : vector<32x128xf32>
    %83 = vector.broadcast %12 : f32 to vector<32x128xf32>
    %84 = arith.mulf %83, %80 : vector<32x128xf32>
    %85 = arith.select %82, %80, %84 : vector<32x128xi1>, vector<32x128xf32>
    %86 = arith.truncf %85 : vector<32x128xf32> to vector<32x128xbf16>
    %c0_37 = arith.constant 0 : index
    %c0_38 = arith.constant 0 : index
    %c0_39 = arith.constant 0 : index
    %87 = vector.load %arg11[%c0_37, %c0_38, %c0_39] : memref<2x128x128xbf16, #tpu.memory_space<vmem>>, vector<1x128x128xbf16>
    %88 = vector.shape_cast %87 : vector<1x128x128xbf16> to vector<128x128xbf16>
    %cst_40 = arith.constant dense<0.000000e+00> : vector<32x128xf32>
    %89 = tpu.matmul %86, %88, %cst_40 {dimension_numbers = #tpu.dot_dimension_numbers<[1], [0], [0], [1], [0, 0, 1, 1], [], []>} : vector<32x128xbf16>, vector<128x128xbf16>, vector<32x128xf32> -> vector<32x128xf32>
    %c0_41 = arith.constant 0 : index
    %c0_42 = arith.constant 0 : index
    %c0_43 = arith.constant 0 : index
    %90 = vector.load %arg12[%c0_41, %c0_42, %c0_43] : memref<2x1x128xf32, #tpu.memory_space<vmem>>, vector<1x1x128xf32>
    %91 = vector.shape_cast %90 : vector<1x1x128xf32> to vector<1x128xf32>
    %92 = vector.broadcast %91 : vector<1x128xf32> to vector<32x128xf32>
    %93 = arith.addf %89, %92 : vector<32x128xf32>
    %94 = arith.addf %11, %93 : vector<32x128xf32>
    %c1 = arith.constant 1 : index
    %95 = memref.load %arg2[%c1] : memref<2xf32, #tpu.memory_space<smem>>
    %96 = arith.truncf %94 : vector<32x128xf32> to vector<32x128xbf16>
    %c1_44 = arith.constant 1 : index
    %c0_45 = arith.constant 0 : index
    %c0_46 = arith.constant 0 : index
    %97 = vector.load %arg6[%c1_44, %c0_45, %c0_46] : memref<2x128x128xbf16, #tpu.memory_space<vmem>>, vector<1x128x128xbf16>
    %98 = vector.shape_cast %97 : vector<1x128x128xbf16> to vector<128x128xbf16>
    %cst_47 = arith.constant dense<0.000000e+00> : vector<32x128xf32>
    %99 = tpu.matmul %96, %98, %cst_47 {dimension_numbers = #tpu.dot_dimension_numbers<[1], [0], [0], [1], [0, 0, 1, 1], [], []>} : vector<32x128xbf16>, vector<128x128xbf16>, vector<32x128xf32> -> vector<32x128xf32>
    %c1_48 = arith.constant 1 : index
    %c0_49 = arith.constant 0 : index
    %c0_50 = arith.constant 0 : index
    %100 = vector.load %arg7[%c1_48, %c0_49, %c0_50] : memref<2x1x128xf32, #tpu.memory_space<vmem>>, vector<1x1x128xf32>
    %101 = vector.shape_cast %100 : vector<1x1x128xf32> to vector<1x128xf32>
    %102 = vector.broadcast %101 : vector<1x128xf32> to vector<32x128xf32>
    %103 = arith.addf %99, %102 : vector<32x128xf32>
    %cst_51 = arith.constant 0.000000e+00 : f32
    %104 = vector.broadcast %cst_51 : f32 to vector<32x128xf32>
    %105 = arith.cmpf oge, %103, %104 : vector<32x128xf32>
    %106 = vector.broadcast %95 : f32 to vector<32x128xf32>
    %107 = arith.mulf %106, %103 : vector<32x128xf32>
    %108 = arith.select %105, %103, %107 : vector<32x128xi1>, vector<32x128xf32>
    %cst_52 = arith.constant dense<0.000000e+00> : vector<32xf32>
    %109 = vector.multi_reduction <add>, %108, %cst_52 [1] : vector<32x128xf32> to vector<32xf32>
    %110 = vector.shape_cast %109 : vector<32xf32> to vector<32x1xf32>
    %cst_53 = arith.constant 3.125000e-02 : f32
    %111 = vector.broadcast %cst_53 : f32 to vector<32x1xf32>
    %112 = arith.mulf %110, %111 : vector<32x1xf32>
    %113 = arith.mulf %108, %108 : vector<32x128xf32>
    %cst_54 = arith.constant dense<0.000000e+00> : vector<32xf32>
    %114 = vector.multi_reduction <add>, %113, %cst_54 [1] : vector<32x128xf32> to vector<32xf32>
    %115 = vector.shape_cast %114 : vector<32xf32> to vector<32x1xf32>
    %cst_55 = arith.constant 3.125000e-02 : f32
    %116 = vector.broadcast %cst_55 : f32 to vector<32x1xf32>
    %117 = arith.mulf %115, %116 : vector<32x1xf32>
    %118 = arith.mulf %112, %112 : vector<32x1xf32>
    %119 = arith.subf %117, %118 : vector<32x1xf32>
    %cst_56 = arith.constant 0.000000e+00 : f32
    %120 = vector.broadcast %cst_56 : f32 to vector<32x1xf32>
    %121 = arith.maximumf %119, %120 : vector<32x1xf32>
    %122 = vector.broadcast %112 : vector<32x1xf32> to vector<32x128xf32>
    %123 = arith.subf %108, %122 : vector<32x128xf32>
    %cst_57 = arith.constant 9.99999974E-6 : f32
    %124 = vector.broadcast %cst_57 : f32 to vector<32x1xf32>
    %125 = arith.addf %121, %124 : vector<32x1xf32>
    %126 = math.rsqrt %125 : vector<32x1xf32>
    %127 = vector.broadcast %126 : vector<32x1xf32> to vector<32x128xf32>
    %128 = arith.mulf %123, %127 : vector<32x128xf32>
    %c1_58 = arith.constant 1 : index
    %c0_59 = arith.constant 0 : index
    %c0_60 = arith.constant 0 : index
    %129 = vector.load %arg8[%c1_58, %c0_59, %c0_60] : memref<2x1x128xf32, #tpu.memory_space<vmem>>, vector<1x1x128xf32>
    %130 = vector.shape_cast %129 : vector<1x1x128xf32> to vector<1x128xf32>
    %131 = vector.broadcast %130 : vector<1x128xf32> to vector<32x128xf32>
    %132 = arith.addf %128, %131 : vector<32x128xf32>
    %c1_61 = arith.constant 1 : index
    %c0_62 = arith.constant 0 : index
    %c0_63 = arith.constant 0 : index
    %133 = vector.load %arg9[%c1_61, %c0_62, %c0_63] : memref<2x3x128xf32, #tpu.memory_space<vmem>>, vector<1x3x128xf32>
    %134 = vector.shape_cast %133 : vector<1x3x128xf32> to vector<3x128xf32>
    %c2_i32 = arith.constant 2 : i32
    %135 = vector.broadcast %c2_i32 : i32 to vector<32x1xi32>
    %136 = arith.cmpi sge, %4, %135 : vector<32x1xi32>
    %c2_i32_64 = arith.constant 2 : i32
    %137 = tpu.dynamic_rotate %132 by %c2_i32_64 dim 0 : vector<32x128xf32>, i32 -> vector<32x128xf32>
    %cst_65 = arith.constant 0.000000e+00 : f32
    %138 = vector.shape_cast %136 : vector<32x1xi1> to vector<32x1xi1>
    %139 = vector.broadcast %138 : vector<32x1xi1> to vector<32x128xi1>
    %140 = vector.broadcast %cst_65 : f32 to vector<32x128xf32>
    %141 = arith.select %139, %137, %140 : vector<32x128xi1>, vector<32x128xf32>
    %c14_i32 = arith.constant 14 : i32
    %142 = vector.broadcast %c14_i32 : i32 to vector<32x1xi32>
    %143 = arith.cmpi slt, %4, %142 : vector<32x1xi32>
    %c30_i32 = arith.constant 30 : i32
    %144 = tpu.dynamic_rotate %132 by %c30_i32 dim 0 : vector<32x128xf32>, i32 -> vector<32x128xf32>
    %cst_66 = arith.constant 0.000000e+00 : f32
    %145 = vector.shape_cast %143 : vector<32x1xi1> to vector<32x1xi1>
    %146 = vector.broadcast %145 : vector<32x1xi1> to vector<32x128xi1>
    %147 = vector.broadcast %cst_66 : f32 to vector<32x128xf32>
    %148 = arith.select %146, %144, %147 : vector<32x128xi1>, vector<32x128xf32>
    %149 = vector.extract_strided_slice %134 {offsets = [0, 0], sizes = [1, 128], strides = [1, 1]} : vector<3x128xf32> to vector<1x128xf32>
    %150 = vector.broadcast %149 : vector<1x128xf32> to vector<32x128xf32>
    %151 = arith.mulf %141, %150 : vector<32x128xf32>
    %152 = vector.extract_strided_slice %134 {offsets = [1, 0], sizes = [1, 128], strides = [1, 1]} : vector<3x128xf32> to vector<1x128xf32>
    %153 = vector.broadcast %152 : vector<1x128xf32> to vector<32x128xf32>
    %154 = arith.mulf %132, %153 : vector<32x128xf32>
    %155 = arith.addf %151, %154 : vector<32x128xf32>
    %156 = vector.extract_strided_slice %134 {offsets = [2, 0], sizes = [1, 128], strides = [1, 1]} : vector<3x128xf32> to vector<1x128xf32>
    %157 = vector.broadcast %156 : vector<1x128xf32> to vector<32x128xf32>
    %158 = arith.mulf %148, %157 : vector<32x128xf32>
    %159 = arith.addf %155, %158 : vector<32x128xf32>
    %c1_67 = arith.constant 1 : index
    %c0_68 = arith.constant 0 : index
    %c0_69 = arith.constant 0 : index
    %160 = vector.load %arg10[%c1_67, %c0_68, %c0_69] : memref<2x1x128xf32, #tpu.memory_space<vmem>>, vector<1x1x128xf32>
    %161 = vector.shape_cast %160 : vector<1x1x128xf32> to vector<1x128xf32>
    %162 = vector.broadcast %161 : vector<1x128xf32> to vector<32x128xf32>
    %163 = arith.addf %159, %162 : vector<32x128xf32>
    %cst_70 = arith.constant 0.000000e+00 : f32
    %164 = vector.broadcast %cst_70 : f32 to vector<32x128xf32>
    %165 = arith.cmpf oge, %163, %164 : vector<32x128xf32>
    %166 = vector.broadcast %95 : f32 to vector<32x128xf32>
    %167 = arith.mulf %166, %163 : vector<32x128xf32>
    %168 = arith.select %165, %163, %167 : vector<32x128xi1>, vector<32x128xf32>
    %169 = arith.truncf %168 : vector<32x128xf32> to vector<32x128xbf16>
    %c1_71 = arith.constant 1 : index
    %c0_72 = arith.constant 0 : index
    %c0_73 = arith.constant 0 : index
    %170 = vector.load %arg11[%c1_71, %c0_72, %c0_73] : memref<2x128x128xbf16, #tpu.memory_space<vmem>>, vector<1x128x128xbf16>
    %171 = vector.shape_cast %170 : vector<1x128x128xbf16> to vector<128x128xbf16>
    %cst_74 = arith.constant dense<0.000000e+00> : vector<32x128xf32>
    %172 = tpu.matmul %169, %171, %cst_74 {dimension_numbers = #tpu.dot_dimension_numbers<[1], [0], [0], [1], [0, 0, 1, 1], [], []>} : vector<32x128xbf16>, vector<128x128xbf16>, vector<32x128xf32> -> vector<32x128xf32>
    %c1_75 = arith.constant 1 : index
    %c0_76 = arith.constant 0 : index
    %c0_77 = arith.constant 0 : index
    %173 = vector.load %arg12[%c1_75, %c0_76, %c0_77] : memref<2x1x128xf32, #tpu.memory_space<vmem>>, vector<1x1x128xf32>
    %174 = vector.shape_cast %173 : vector<1x1x128xf32> to vector<1x128xf32>
    %175 = vector.broadcast %174 : vector<1x128xf32> to vector<32x128xf32>
    %176 = arith.addf %172, %175 : vector<32x128xf32>
    %177 = arith.addf %94, %176 : vector<32x128xf32>
    %178 = vector.extract_strided_slice %177 {offsets = [8, 0], sizes = [16, 128], strides = [1, 1]} : vector<32x128xf32> to vector<16x128xf32>
    %c0_78 = arith.constant 0 : index
    %c0_79 = arith.constant 0 : index
    %c0_80 = arith.constant 0 : index
    %179 = vector.load %arg13[%c0_78, %c0_79, %c0_80] : memref<1x16x128xf32, #tpu.memory_space<vmem>>, vector<1x16x128xf32>
    %180 = vector.shape_cast %179 : vector<1x16x128xf32> to vector<16x128xf32>
    %181 = vector.shape_cast %178 : vector<16x128xf32> to vector<1x16x128xf32>
    tpu.vector_store %arg13[%c0_78, %c0_79, %c0_80], %181 {strides = array<i32>} : memref<1x16x128xf32, #tpu.memory_space<vmem>>, vector<1x16x128xf32>,
    return
  }
  func.func @transform_0(%arg0: i32, %arg1: i32) -> i32 {
    %c0_i32 = arith.constant 0 : i32
    %c0_i32_0 = arith.constant 0 : i32
    return %c0_i32 : i32
  }
  func.func @transform_1(%arg0: i32, %arg1: i32) -> (i32, i32, i32) {
    %c0_i32 = arith.constant 0 : i32
    %c0_i32_0 = arith.constant 0 : i32
    return %arg0, %arg1, %c0_i32 : i32, i32, i32
  }
  func.func @transform_2(%arg0: i32, %arg1: i32) -> (i32, i32, i32, i32) {
    %c0_i32 = arith.constant 0 : i32
    %c0_i32_0 = arith.constant 0 : i32
    %c0_i32_1 = arith.constant 0 : i32
    return %arg0, %arg1, %c0_i32, %c0_i32_0 : i32, i32, i32, i32
  }
  func.func @transform_3(%arg0: i32, %arg1: i32) -> (i32, i32, i32, i32) {
    %c0_i32 = arith.constant 0 : i32
    %c0_i32_0 = arith.constant 0 : i32
    %c0_i32_1 = arith.constant 0 : i32
    return %arg0, %arg1, %c0_i32, %c0_i32_0 : i32, i32, i32, i32
  }
  func.func @transform_4(%arg0: i32, %arg1: i32) -> (i32, i32, i32) {
    %c0_i32 = arith.constant 0 : i32
    %c0_i32_0 = arith.constant 0 : i32
    %c0_i32_1 = arith.constant 0 : i32
    %c0_i32_2 = arith.constant 0 : i32
    return %c0_i32, %c0_i32_0, %c0_i32_1 : i32, i32, i32
  }
  func.func @transform_5(%arg0: i32, %arg1: i32) -> (i32, i32, i32) {
    %c0_i32 = arith.constant 0 : i32
    %c0_i32_0 = arith.constant 0 : i32
    %c0_i32_1 = arith.constant 0 : i32
    %c0_i32_2 = arith.constant 0 : i32
    return %c0_i32, %c0_i32_0, %c0_i32_1 : i32, i32, i32
  }
  func.func @transform_6(%arg0: i32, %arg1: i32) -> (i32, i32, i32) {
    %c0_i32 = arith.constant 0 : i32
    %c0_i32_0 = arith.constant 0 : i32
    %c0_i32_1 = arith.constant 0 : i32
    %c0_i32_2 = arith.constant 0 : i32
    return %c0_i32, %c0_i32_0, %c0_i32_1 : i32, i32, i32
  }
  func.func @transform_7(%arg0: i32, %arg1: i32) -> (i32, i32, i32) {
    %c0_i32 = arith.constant 0 : i32
    %c0_i32_0 = arith.constant 0 : i32
    %c0_i32_1 = arith.constant 0 : i32
    %c0_i32_2 = arith.constant 0 : i32
    return %c0_i32, %c0_i32_0, %c0_i32_1 : i32, i32, i32
  }
  func.func @transform_8(%arg0: i32, %arg1: i32) -> (i32, i32, i32) {
    %c0_i32 = arith.constant 0 : i32
    %c0_i32_0 = arith.constant 0 : i32
    %c0_i32_1 = arith.constant 0 : i32
    %c0_i32_2 = arith.constant 0 : i32
    return %c0_i32, %c0_i32_0, %c0_i32_1 : i32, i32, i32
  }
  func.func @transform_9(%arg0: i32, %arg1: i32) -> (i32, i32, i32) {
    %c0_i32 = arith.constant 0 : i32
    %c0_i32_0 = arith.constant 0 : i32
    %c0_i32_1 = arith.constant 0 : i32
    %c0_i32_2 = arith.constant 0 : i32
    return %c0_i32, %c0_i32_0, %c0_i32_1 : i32, i32, i32
  }
  func.func @transform_10(%arg0: i32, %arg1: i32) -> (i32, i32, i32) {
    %c0_i32 = arith.constant 0 : i32
    %c0_i32_0 = arith.constant 0 : i32
    %c0_i32_1 = arith.constant 0 : i32
    %c0_i32_2 = arith.constant 0 : i32
    return %c0_i32, %c0_i32_0, %c0_i32_1 : i32, i32, i32
  }
  func.func @transform_11(%arg0: i32, %arg1: i32) -> (i32, i32, i32) {
    %c0_i32 = arith.constant 0 : i32
    %c0_i32_0 = arith.constant 0 : i32
    return %arg0, %arg1, %c0_i32 : i32, i32, i32
  }
}

</mosaic_0001>

<llo_original>
// kernel: tpu_custom_call.1
$region0: #{tpu_custom_call.1}
  #allocation0 [shape = 'u32[]', space=smem, size = 0x4, offset = 0x4, fixed_abs, tag = 'smem constant byte address 0x4 - core index']
  #allocation1 [shape = 'u32[144,128]{1,0:T(1,128)}', space=vmem, size = 0x12000, scoped, tag = 'internal scratch']
  %s0 = inlined_call_operand.hbm [shape: f32[2], index: 0, kind: input, shape index: {}]
  %s1 = inlined_call_operand.hbm [shape: f32[2,16,128], index: 1, kind: input, shape index: {}]
  %s2 = inlined_call_operand.vmem [shape: f32[2,1,8,128], index: 2, kind: input, shape index: {}]
  %s3 = inlined_call_operand.hbm [shape: f32[2,1,8,128], index: 3, kind: input, shape index: {}]
  %s4 = inlined_call_operand.hbm [shape: bf16[2,128,128], index: 4, kind: input, shape index: {}]
  %s5 = inlined_call_operand.vmem [shape: f32[2,1,128], index: 5, kind: input, shape index: {}]
  %s6 = inlined_call_operand.vmem [shape: f32[2,1,128], index: 6, kind: input, shape index: {}]
  %s7 = inlined_call_operand.vmem [shape: f32[2,3,128], index: 7, kind: input, shape index: {}]
  %s8 = inlined_call_operand.vmem [shape: f32[2,1,128], index: 8, kind: input, shape index: {}]
  %s9 = inlined_call_operand.hbm [shape: bf16[2,128,128], index: 9, kind: input, shape index: {}]
  %s10 = inlined_call_operand.vmem [shape: f32[2,1,128], index: 10, kind: input, shape index: {}]
  %s11 = inlined_call_operand.hbm [shape: f32[2,16,128], index: 11, kind: output, shape index: {}]
  %s12 = sld [smem:[#allocation0]]
  $region97: #{tpu_custom_call.1} parent=0
    _
  %s14 = ssub.s32 1, %s12
  %s15 = scalar_select 0, %s14, %s12
  $region1: #{tpu_custom_call.1} parent=0
    #allocation2 [shape = 'u8[512]{0}', space=smem, size = 0x200, scoped, tag = 'input window, operand 0, single buffered']
    #allocation3 [shape = 's32[2]{0}', space=sflag, size = 0x8, scoped, tag = 'scoped memory for tpu_custom_call.1']
    #allocation4 [shape = 's32[2]{0}', space=sflag, size = 0x8, scoped, tag = 'scoped memory for tpu_custom_call.1']
    #allocation5 [shape = 's32[2]{0}', space=sflag, size = 0x8, scoped, tag = 'scoped memory for tpu_custom_call.1']
    #allocation6 [shape = 'u8[16384]{0}', space=vmem, size = 0x4000, scoped, tag = 'input window, operand 1']
    #allocation7 [shape = 'u8[8192]{0}', space=vmem, size = 0x2000, scoped, tag = 'input window, operand 3']
    #allocation8 [shape = 's32[2]{0}', space=sflag, size = 0x8, scoped, tag = 'scoped memory for tpu_custom_call.1']
    #allocation9 [shape = 'u8[65536]{0}', space=vmem, size = 0x10000, scoped, tag = 'input window, operand 4, single buffered']
    #allocation10 [shape = 'u8[65536]{0}', space=vmem, size = 0x10000, scoped, tag = 'input window, operand 9, single buffered']
    #allocation11 [shape = 's32[1]{0}', space=sflag, size = 0x4, scoped, tag = 'scoped memory for tpu_custom_call.1']
    #allocation12 [shape = 'u8[16384]{0}', space=vmem, size = 0x4000, scoped, tag = 'output window, operand 0']
    %16 = vsyncpa [#allocation5], 0
    %17 = vsyncpa [#allocation3], 0
    %s18 = scalar_lea.sflag [#allocation3], 1
    %19 = vsyncpa %s18, 0
    %20 = vsyncpa [#allocation8], 0
    %s21 = scalar_lea.sflag [#allocation8], 1
    %22 = vsyncpa %s21, 0
    %23 = vsyncpa [#allocation11], 0
    %24 = vsyncpa [#allocation4], 0
    %s25 = scalar_lea.sflag [#allocation4], 1
    %26 = vsyncpa %s25, 0
    loop: start=0, step=1, limit=4
    $region2: #{tpu_custom_call.1} parent=1 // loop_pre_header
      _
    $region3: #{tpu_custom_call.1} parent=1 // loop_header
      %s28 = sphi 0, %s32
      %p29 = scmp.ge.s32.totalorder %s28, 4
      %s35 = sphi 0, %s47
      %s36 = sphi 0, %s43
      %s37 = sphi 0, %s35
      %s38 = sphi 0, %s36
      %s39 = sphi 0, %s37
      %s40 = sphi 0, %s38
      %s48 = sphi 0, %s48
      %s50 = sphi 0, %s48
      %s51 = sphi 0, %s50
      %s65 = sphi 0, %s51
      %s73 = sphi 0, %s75
      %s76 = sphi 0, %s73
      %s77 = sphi 0, %s76
      %s93 = sphi 0, %s77
      %s101 = sphi 0, %s103
      %s104 = sphi 0, %s101
      %s105 = sphi 0, %s104
      %s121 = sphi 0, %s105
      %s129 = sphi 0, %s131
      %s132 = sphi 0, %s129
      %s133 = sphi 0, %s132
      %s149 = sphi 0, %s133
      %s153 = sphi 0, %s153
      %s155 = sphi 0, %s153
      %s156 = sphi 0, %s155
      %s170 = sphi 0, %s156
      %s174 = sphi 0, %s174
      %s176 = sphi 0, %s174
      %s177 = sphi 0, %s176
      %s191 = sphi 0, %s177
      %s195 = sphi 0, %s195
      %s197 = sphi 0, %s195
      %s198 = sphi 0, %s197
      %s212 = sphi 0, %s198
      %s216 = sphi 0, %s216
      %s218 = sphi 0, %s216
      %s219 = sphi 0, %s218
      %s233 = sphi 0, %s219
      %s237 = sphi 0, %s237
      %s239 = sphi 0, %s237
      %s240 = sphi 0, %s239
      %s254 = sphi 0, %s240
      %s258 = sphi 0, %s258
      %s260 = sphi 0, %s258
      %s261 = sphi 0, %s260
      %s275 = sphi 0, %s261
      %s279 = sphi 0, %s279
      %s281 = sphi 0, %s279
      %s282 = sphi 0, %s281
      %s296 = sphi 0, %s282
      %s304 = sphi 0, %s306
      %s307 = sphi 0, %s304
      %s308 = sphi 0, %s307
      %s324 = sphi 0, %s308
    $region4: #{tpu_custom_call.1} parent=1 // loop_header_branch
      %31 = sbr.rel (%p29) target = $region8
    $region5: #{tpu_custom_call.1} parent=1 // loop_body
      %s33 = ssub.s32 %s28, 1
      %s34 = ssub.s32 %s28, 2
      %s41 = sadd.s32 1, %s36
      %p42 = scmp.ge.s32.totalorder %s41, 1
      %s43 = scalar_select %p42, 0, %s41
      %s44 = sadd.s32 1, %s35
      %s45 = scalar_select %p42, %s44, %s35
      %p46 = scmp.ge.s32.totalorder %s45, 2
      %s47 = scalar_select %p46, 0, %s45
      %s49 = sadd.s32 %s48, 1
      %p52 = scmp.eq.s32.totalorder %s28, 1
      %p53 = scmp.ne.s32.totalorder %s48, %s50
      %p54 = scmp.eq.s32.totalorder %s28, 0
      %p55 = por %p53, %p54
      %p56 = scmp.ne.s32.totalorder %s48, %s50
      %p57 = scmp.eq.s32.totalorder %s33, 1
      %p58 = por %p56, %p57
      %p59 = scmp.ne.s32.totalorder %s50, %s51
      %p60 = scmp.eq.s32.totalorder %s33, 0
      %p61 = por %p59, %p60
      %p62 = scmp.ne.s32.totalorder %s50, %s51
      %p63 = scmp.eq.s32.totalorder %s34, 1
      %p64 = por %p62, %p63
      %p66 = scmp.ne.s32.totalorder %s51, %s65
      %p67 = scmp.eq.s32.totalorder %s34, 0
      %p68 = por %p66, %p67
      %s69 = ssub.s32 %s35, %s47
      %s70 = ssub.s32 %s36, %s43
      %s71 = sor.u32 %s69, %s70
      %p72 = scmp.eq.s32.totalorder %s71, 0
      %s74 = sadd.s32 %s73, 1
      %s75 = scalar_select %p72, %s73, %s74
      %p78 = pneg %p72
      %p79 = scmp.eq.s32.totalorder %s28, 1
      %p80 = por %p78, %p79
      %p81 = scmp.ne.s32.totalorder %s73, %s76
      %p82 = scmp.eq.s32.totalorder %s28, 0
      %p83 = por %p81, %p82
      %p84 = scmp.ne.s32.totalorder %s73, %s76
      %p85 = scmp.eq.s32.totalorder %s33, 1
      %p86 = por %p84, %p85
      %p87 = scmp.ne.s32.totalorder %s76, %s77
      %p88 = scmp.eq.s32.totalorder %s33, 0
      %p89 = por %p87, %p88
      %p90 = scmp.ne.s32.totalorder %s76, %s77
      %p91 = scmp.eq.s32.totalorder %s34, 1
      %p92 = por %p90, %p91
      %p94 = scmp.ne.s32.totalorder %s77, %s93
      %p95 = scmp.eq.s32.totalorder %s34, 0
      %p96 = por %p94, %p95
      %s97 = ssub.s32 %s35, %s47
      %s98 = ssub.s32 %s36, %s43
      %s99 = sor.u32 %s97, %s98
      %p100 = scmp.eq.s32.totalorder %s99, 0
      %s102 = sadd.s32 %s101, 1
      %s103 = scalar_select %p100, %s101, %s102
      %p106 = pneg %p100
      %p107 = scmp.eq.s32.totalorder %s28, 1
      %p108 = por %p106, %p107
      %p109 = scmp.ne.s32.totalorder %s101, %s104
      %p110 = scmp.eq.s32.totalorder %s28, 0
      %p111 = por %p109, %p110
      %p112 = scmp.ne.s32.totalorder %s101, %s104
      %p113 = scmp.eq.s32.totalorder %s33, 1
      %p114 = por %p112, %p113
      %p115 = scmp.ne.s32.totalorder %s104, %s105
      %p116 = scmp.eq.s32.totalorder %s33, 0
      %p117 = por %p115, %p116
      %p118 = scmp.ne.s32.totalorder %s104, %s105
      %p119 = scmp.eq.s32.totalorder %s34, 1
      %p120 = por %p118, %p119
      %p122 = scmp.ne.s32.totalorder %s105, %s121
      %p123 = scmp.eq.s32.totalorder %s34, 0
      %p124 = por %p122, %p123
      %s125 = ssub.s32 %s35, %s47
      %s126 = ssub.s32 %s36, %s43
      %s127 = sor.u32 %s125, %s126
      %p128 = scmp.eq.s32.totalorder %s127, 0
      %s130 = sadd.s32 %s129, 1
      %s131 = scalar_select %p128, %s129, %s130
      %p134 = pneg %p128
      %p135 = scmp.eq.s32.totalorder %s28, 1
      %p136 = por %p134, %p135
      %p137 = scmp.ne.s32.totalorder %s129, %s132
      %p138 = scmp.eq.s32.totalorder %s28, 0
      %p139 = por %p137, %p138
      %p140 = scmp.ne.s32.totalorder %s129, %s132
      %p141 = scmp.eq.s32.totalorder %s33, 1
      %p142 = por %p140, %p141
      %p143 = scmp.ne.s32.totalorder %s132, %s133
      %p144 = scmp.eq.s32.totalorder %s33, 0
      %p145 = por %p143, %p144
      %p146 = scmp.ne.s32.totalorder %s132, %s133
      %p147 = scmp.eq.s32.totalorder %s34, 1
      %p148 = por %p146, %p147
      %p150 = scmp.ne.s32.totalorder %s133, %s149
      %p151 = scmp.eq.s32.totalorder %s34, 0
      %p152 = por %p150, %p151
      %s154 = sadd.s32 %s153, 1
      %p157 = scmp.eq.s32.totalorder %s28, 1
      %p158 = scmp.ne.s32.totalorder %s153, %s155
      %p159 = scmp.eq.s32.totalorder %s28, 0
      %p160 = por %p158, %p159
      %p161 = scmp.ne.s32.totalorder %s153, %s155
      %p162 = scmp.eq.s32.totalorder %s33, 1
      %p163 = por %p161, %p162
      %p164 = scmp.ne.s32.totalorder %s155, %s156
      %p165 = scmp.eq.s32.totalorder %s33, 0
      %p166 = por %p164, %p165
      %p167 = scmp.ne.s32.totalorder %s155, %s156
      %p168 = scmp.eq.s32.totalorder %s34, 1
      %p169 = por %p167, %p168
      %p171 = scmp.ne.s32.totalorder %s156, %s170
      %p172 = scmp.eq.s32.totalorder %s34, 0
      %p173 = por %p171, %p172
      %s175 = sadd.s32 %s174, 1
      %p178 = scmp.eq.s32.totalorder %s28, 1
      %p179 = scmp.ne.s32.totalorder %s174, %s176
      %p180 = scmp.eq.s32.totalorder %s28, 0
      %p181 = por %p179, %p180
      %p182 = scmp.ne.s32.totalorder %s174, %s176
      %p183 = scmp.eq.s32.totalorder %s33, 1
      %p184 = por %p182, %p183
      %p185 = scmp.ne.s32.totalorder %s176, %s177
      %p186 = scmp.eq.s32.totalorder %s33, 0
      %p187 = por %p185, %p186
      %p188 = scmp.ne.s32.totalorder %s176, %s177
      %p189 = scmp.eq.s32.totalorder %s34, 1
      %p190 = por %p188, %p189
      %p192 = scmp.ne.s32.totalorder %s177, %s191
      %p193 = scmp.eq.s32.totalorder %s34, 0
      %p194 = por %p192, %p193
      %s196 = sadd.s32 %s195, 1
      %p199 = scmp.eq.s32.totalorder %s28, 1
      %p200 = scmp.ne.s32.totalorder %s195, %s197
      %p201 = scmp.eq.s32.totalorder %s28, 0
      %p202 = por %p200, %p201
      %p203 = scmp.ne.s32.totalorder %s195, %s197
      %p204 = scmp.eq.s32.totalorder %s33, 1
      %p205 = por %p203, %p204
      %p206 = scmp.ne.s32.totalorder %s197, %s198
      %p207 = scmp.eq.s32.totalorder %s33, 0
      %p208 = por %p206, %p207
      %p209 = scmp.ne.s32.totalorder %s197, %s198
      %p210 = scmp.eq.s32.totalorder %s34, 1
      %p211 = por %p209, %p210
      %p213 = scmp.ne.s32.totalorder %s198, %s212
      %p214 = scmp.eq.s32.totalorder %s34, 0
      %p215 = por %p213, %p214
      %s217 = sadd.s32 %s216, 1
      %p220 = scmp.eq.s32.totalorder %s28, 1
      %p221 = scmp.ne.s32.totalorder %s216, %s218
      %p222 = scmp.eq.s32.totalorder %s28, 0
      %p223 = por %p221, %p222
      %p224 = scmp.ne.s32.totalorder %s216, %s218
      %p225 = scmp.eq.s32.totalorder %s33, 1
      %p226 = por %p224, %p225
      %p227 = scmp.ne.s32.totalorder %s218, %s219
      %p228 = scmp.eq.s32.totalorder %s33, 0
      %p229 = por %p227, %p228
      %p230 = scmp.ne.s32.totalorder %s218, %s219
      %p231 = scmp.eq.s32.totalorder %s34, 1
      %p232 = por %p230, %p231
      %p234 = scmp.ne.s32.totalorder %s219, %s233
      %p235 = scmp.eq.s32.totalorder %s34, 0
      %p236 = por %p234, %p235
      %s238 = sadd.s32 %s237, 1
      %p241 = scmp.eq.s32.totalorder %s28, 1
      %p242 = scmp.ne.s32.totalorder %s237, %s239
      %p243 = scmp.eq.s32.totalorder %s28, 0
      %p244 = por %p242, %p243
      %p245 = scmp.ne.s32.totalorder %s237, %s239
      %p246 = scmp.eq.s32.totalorder %s33, 1
      %p247 = por %p245, %p246
      %p248 = scmp.ne.s32.totalorder %s239, %s240
      %p249 = scmp.eq.s32.totalorder %s33, 0
      %p250 = por %p248, %p249
      %p251 = scmp.ne.s32.totalorder %s239, %s240
      %p252 = scmp.eq.s32.totalorder %s34, 1
      %p253 = por %p251, %p252
      %p255 = scmp.ne.s32.totalorder %s240, %s254
      %p256 = scmp.eq.s32.totalorder %s34, 0
      %p257 = por %p255, %p256
      %s259 = sadd.s32 %s258, 1
      %p262 = scmp.eq.s32.totalorder %s28, 1
      %p263 = scmp.ne.s32.totalorder %s258, %s260
      %p264 = scmp.eq.s32.totalorder %s28, 0
      %p265 = por %p263, %p264
      %p266 = scmp.ne.s32.totalorder %s258, %s260
      %p267 = scmp.eq.s32.totalorder %s33, 1
      %p268 = por %p266, %p267
      %p269 = scmp.ne.s32.totalorder %s260, %s261
      %p270 = scmp.eq.s32.totalorder %s33, 0
      %p271 = por %p269, %p270
      %p272 = scmp.ne.s32.totalorder %s260, %s261
      %p273 = scmp.eq.s32.totalorder %s34, 1
      %p274 = por %p272, %p273
      %p276 = scmp.ne.s32.totalorder %s261, %s275
      %p277 = scmp.eq.s32.totalorder %s34, 0
      %p278 = por %p276, %p277
      %s280 = sadd.s32 %s279, 1
      %p283 = scmp.eq.s32.totalorder %s28, 1
      %p284 = scmp.ne.s32.totalorder %s279, %s281
      %p285 = scmp.eq.s32.totalorder %s28, 0
      %p286 = por %p284, %p285
      %p287 = scmp.ne.s32.totalorder %s279, %s281
      %p288 = scmp.eq.s32.totalorder %s33, 1
      %p289 = por %p287, %p288
      %p290 = scmp.ne.s32.totalorder %s281, %s282
      %p291 = scmp.eq.s32.totalorder %s33, 0
      %p292 = por %p290, %p291
      %p293 = scmp.ne.s32.totalorder %s281, %s282
      %p294 = scmp.eq.s32.totalorder %s34, 1
      %p295 = por %p293, %p294
      %p297 = scmp.ne.s32.totalorder %s282, %s296
      %p298 = scmp.eq.s32.totalorder %s34, 0
      %p299 = por %p297, %p298
      %s300 = ssub.s32 %s35, %s47
      %s301 = ssub.s32 %s36, %s43
      %s302 = sor.u32 %s300, %s301
      %p303 = scmp.eq.s32.totalorder %s302, 0
      %s305 = sadd.s32 %s304, 1
      %s306 = scalar_select %p303, %s304, %s305
      %p309 = pneg %p303
      %p310 = scmp.eq.s32.totalorder %s28, 1
      %p311 = por %p309, %p310
      %p312 = scmp.ne.s32.totalorder %s304, %s307
      %p313 = scmp.eq.s32.totalorder %s28, 0
      %p314 = por %p312, %p313
      %p315 = scmp.ne.s32.totalorder %s304, %s307
      %p316 = scmp.eq.s32.totalorder %s33, 1
      %p317 = por %p315, %p316
      %p318 = scmp.ne.s32.totalorder %s307, %s308
      %p319 = scmp.eq.s32.totalorder %s33, 0
      %p320 = por %p318, %p319
      %p321 = scmp.ne.s32.totalorder %s307, %s308
      %p322 = scmp.eq.s32.totalorder %s34, 1
      %p323 = por %p321, %p322
      %p325 = scmp.ne.s32.totalorder %s308, %s324
      %p326 = scmp.eq.s32.totalorder %s34, 0
      %p327 = por %p325, %p326
      %p328 = scmp.le.s32.totalorder 1, %s28
      %p329 = scmp.lt.s32.totalorder %s28, 3
      %p330 = pnand %p328, %p329
      %p331 = pneg %p330
      // Predicated region
      $region9: #{tpu_custom_call.1} parent=5 // pred_check
        _
      $region10: #{tpu_custom_call.1} parent=5 // pred_check_branch
        %333 = sbr.rel (%p330) target = $region12
      $region11: #{tpu_custom_call.1} parent=5 // pred_region
        %s334 = ssub.s32 %s28, 1
        // Predicated region
        $region13: #{tpu_custom_call.1} parent=11 // pred_check
          %p335 = pneg %p61
        $region14: #{tpu_custom_call.1} parent=11 // pred_check_branch
          %337 = sbr.rel (%p335) target = $region16
        $region15: #{tpu_custom_call.1} parent=11 // pred_region
          %s339 = ssub.s32 16, 16
          %340 = vsyncadd [#allocation5], %s339
          %343 = dma.hbm_to_smem %s0, 16, [#allocation2], [#allocation5]
        $region16: #{tpu_custom_call.1} parent=11 // pred_fallthru
          _
        // Predicated region
        $region17: #{tpu_custom_call.1} parent=11 // pred_check
          %p344 = pneg %p166
        $region18: #{tpu_custom_call.1} parent=11 // pred_check_branch
          %346 = sbr.rel (%p344) target = $region20
        $region19: #{tpu_custom_call.1} parent=11 // pred_region
          %s348 = ssub.s32 2048, 2048
          %349 = vsyncadd [#allocation8], %s348
          %s350 = sshll.u32 [#allocation9], 4
          %s351 = int_to_ptr.vmem [resolvable:$true] %s350
          %356 = dma.hbm_to_vmem [thread:$0]  %s4, 2048, %s351, [#allocation8], 64, 64, 4
        $region20: #{tpu_custom_call.1} parent=11 // pred_fallthru
          _
        // Predicated region
        $region21: #{tpu_custom_call.1} parent=11 // pred_check
          %p357 = pneg %p187
        $region22: #{tpu_custom_call.1} parent=11 // pred_check_branch
          %359 = sbr.rel (%p357) target = $region24
        $region23: #{tpu_custom_call.1} parent=11 // pred_region
          _
        $region24: #{tpu_custom_call.1} parent=11 // pred_fallthru
          _
        // Predicated region
        $region25: #{tpu_custom_call.1} parent=11 // pred_check
          %p360 = pneg %p208
        $region26: #{tpu_custom_call.1} parent=11 // pred_check_branch
          %362 = sbr.rel (%p360) target = $region28
        $region27: #{tpu_custom_call.1} parent=11 // pred_region
          _
        $region28: #{tpu_custom_call.1} parent=11 // pred_fallthru
          _
        // Predicated region
        $region29: #{tpu_custom_call.1} parent=11 // pred_check
          %p363 = pneg %p229
        $region30: #{tpu_custom_call.1} parent=11 // pred_check_branch
          %365 = sbr.rel (%p363) target = $region32
        $region31: #{tpu_custom_call.1} parent=11 // pred_region
          _
        $region32: #{tpu_custom_call.1} parent=11 // pred_fallthru
          _
        // Predicated region
        $region33: #{tpu_custom_call.1} parent=11 // pred_check
          %p366 = pneg %p250
        $region34: #{tpu_custom_call.1} parent=11 // pred_check_branch
          %368 = sbr.rel (%p366) target = $region36
        $region35: #{tpu_custom_call.1} parent=11 // pred_region
          _
        $region36: #{tpu_custom_call.1} parent=11 // pred_fallthru
          _
        // Predicated region
        $region37: #{tpu_custom_call.1} parent=11 // pred_check
          %p369 = pneg %p271
        $region38: #{tpu_custom_call.1} parent=11 // pred_check_branch
          %371 = sbr.rel (%p369) target = $region40
        $region39: #{tpu_custom_call.1} parent=11 // pred_region
          %s373 = ssub.s32 2048, 2048
          %374 = vsyncadd [#allocation11], %s373
          %s375 = sshll.u32 [#allocation10], 4
          %s376 = int_to_ptr.vmem [resolvable:$true] %s375
          %381 = dma.hbm_to_vmem [thread:$0]  %s9, 2048, %s376, [#allocation11], 64, 64, 4
        $region40: #{tpu_custom_call.1} parent=11 // pred_fallthru
          _
        // Predicated region
        $region41: #{tpu_custom_call.1} parent=11 // pred_check
          %p382 = pneg %p292
        $region42: #{tpu_custom_call.1} parent=11 // pred_check_branch
          %384 = sbr.rel (%p382) target = $region44
        $region43: #{tpu_custom_call.1} parent=11 // pred_region
          _
        $region44: #{tpu_custom_call.1} parent=11 // pred_fallthru
          _
      $region12: #{tpu_custom_call.1} parent=5 // pred_fallthru
        _
      %p385 = scmp.lt.s32.totalorder %s28, 2
      // Predicated region
      $region45: #{tpu_custom_call.1} parent=5 // pred_check
        %p386 = pneg %p385
      $region46: #{tpu_custom_call.1} parent=5 // pred_check_branch
        %388 = sbr.rel (%p386) target = $region48
      $region47: #{tpu_custom_call.1} parent=5 // pred_region
        // Predicated region
        $region49: #{tpu_custom_call.1} parent=47 // pred_check
          %p389 = pneg %p83
        $region50: #{tpu_custom_call.1} parent=47 // pred_check_branch
          %391 = sbr.rel (%p389) target = $region52
        $region51: #{tpu_custom_call.1} parent=47 // pred_region
          %s392 = sand.u32 %s73, 1
          %s393 = scalar_lea.sflag [#allocation3], %s392
          %s394 = sand.u32 %s73, 1
          %s395 = smul.addr %s394, 16
          %s396 = scalar_lea.vmem [#allocation6], %s395
          %s397 = smul.u32 2, %s36
          %s399 = ssub.s32 256, 256
          %400 = vsyncadd %s393, %s399
          %s401 = smul.addr %s35, 2
          %s402 = sadd.s32 %s397, %s401
          %s403 = smul.addr %s402, 128
          %s404 = scalar_lea.hbm %s1, %s403
          %s405 = sshll.u32 %s396, 4
          %s406 = int_to_ptr.vmem [resolvable:$true] %s405
          %411 = dma.hbm_to_vmem [thread:$0]  %s404, 256, %s406, %s393, 128, 128, 8
        $region52: #{tpu_custom_call.1} parent=47 // pred_fallthru
          _
        // Predicated region
        $region53: #{tpu_custom_call.1} parent=47 // pred_check
          %p412 = pneg %p111
        $region54: #{tpu_custom_call.1} parent=47 // pred_check_branch
          %414 = sbr.rel (%p412) target = $region56
        $region55: #{tpu_custom_call.1} parent=47 // pred_region
          %p415 = scmp.lt.s32.totalorder %s35, 1
          %s416 = scalar_select %p415, %s35, 1
          %p417 = scmp.lt.s32.totalorder %s36, 0
          %s418 = scalar_select %p417, %s36, 0
          %s419 = sadd.s32 %s418, %s416
          %s420 = smul.addr %s419, 8
          %s421 = scalar_lea.vmem %s2, %s420
        $region56: #{tpu_custom_call.1} parent=47 // pred_fallthru
          _
        // Predicated region
        $region57: #{tpu_custom_call.1} parent=47 // pred_check
          %p422 = pneg %p139
        $region58: #{tpu_custom_call.1} parent=47 // pred_check_branch
          %424 = sbr.rel (%p422) target = $region60
        $region59: #{tpu_custom_call.1} parent=47 // pred_region
          %s425 = sand.u32 %s28, 1
          %s426 = scalar_lea.sflag [#allocation8], %s425
          %s427 = sand.u32 %s129, 1
          %s428 = smul.addr %s427, 8
          %s429 = scalar_lea.vmem [#allocation7], %s428
          %s431 = ssub.s32 128, 128
          %432 = vsyncadd %s426, %s431
          %s433 = sadd.s32 %s36, %s35
          %s434 = smul.addr %s433, 128
          %s435 = scalar_lea.hbm %s3, %s434
          %s437 = sshll.u32 %s429, 4
          %s438 = int_to_ptr.vmem [resolvable:$true] %s437
          %440 = dma.hbm_to_vmem [thread:$0]  %s435, 128, %s438, %s426
        $region60: #{tpu_custom_call.1} parent=47 // pred_fallthru
          _
      $region48: #{tpu_custom_call.1} parent=5 // pred_fallthru
        _
      %p441 = scmp.le.s32.totalorder 1, %s28
      %p442 = scmp.lt.s32.totalorder %s28, 3
      %p443 = pnand %p441, %p442
      %p444 = pneg %p443
      // Predicated region
      $region61: #{tpu_custom_call.1} parent=5 // pred_check
        _
      $region62: #{tpu_custom_call.1} parent=5 // pred_check_branch
        %446 = sbr.rel (%p443) target = $region64
      $region63: #{tpu_custom_call.1} parent=5 // pred_region
        %s447 = ssub.s32 %s28, 1
        // Predicated region
        $region65: #{tpu_custom_call.1} parent=63 // pred_check
          %p448 = pneg %p61
        $region66: #{tpu_custom_call.1} parent=63 // pred_check_branch
          %450 = sbr.rel (%p448) target = $region68
        $region67: #{tpu_custom_call.1} parent=63 // pred_region
          %451 = dma.done [#allocation5], 16
        $region68: #{tpu_custom_call.1} parent=63 // pred_fallthru
          _
        %s452 = sand.u32 %s76, 1
        %s453 = scalar_lea.sflag [#allocation3], %s452
        %s454 = sand.u32 %s76, 1
        %s455 = smul.addr %s454, 16
        %s456 = scalar_lea.vmem [#allocation6], %s455
        // Predicated region
        $region69: #{tpu_custom_call.1} parent=63 // pred_check
          %p457 = pneg %p89
        $region70: #{tpu_custom_call.1} parent=63 // pred_check_branch
          %459 = sbr.rel (%p457) target = $region72
        $region71: #{tpu_custom_call.1} parent=63 // pred_region
          %460 = dma.done %s453, 256
        $region72: #{tpu_custom_call.1} parent=63 // pred_fallthru
          _
        %s461 = sand.u32 %s33, 1
        %s462 = scalar_lea.sflag [#allocation8], %s461
        %s463 = sand.u32 %s132, 1
        %s464 = smul.addr %s463, 8
        %s465 = scalar_lea.vmem [#allocation7], %s464
        // Predicated region
        $region73: #{tpu_custom_call.1} parent=63 // pred_check
          %p466 = pneg %p145
        $region74: #{tpu_custom_call.1} parent=63 // pred_check_branch
          %468 = sbr.rel (%p466) target = $region76
        $region75: #{tpu_custom_call.1} parent=63 // pred_region
          %469 = dma.done %s462, 128
        $region76: #{tpu_custom_call.1} parent=63 // pred_fallthru
          _
        // Predicated region
        $region77: #{tpu_custom_call.1} parent=63 // pred_check
          %p470 = pneg %p166
        $region78: #{tpu_custom_call.1} parent=63 // pred_check_branch
          %472 = sbr.rel (%p470) target = $region80
        $region79: #{tpu_custom_call.1} parent=63 // pred_region
          %473 = dma.done [#allocation8], 2048
        $region80: #{tpu_custom_call.1} parent=63 // pred_fallthru
          _
        // Predicated region
        $region81: #{tpu_custom_call.1} parent=63 // pred_check
          %p474 = pneg %p271
        $region82: #{tpu_custom_call.1} parent=63 // pred_check_branch
          %476 = sbr.rel (%p474) target = $region84
        $region83: #{tpu_custom_call.1} parent=63 // pred_region
          %477 = dma.done [#allocation11], 2048
        $region84: #{tpu_custom_call.1} parent=63 // pred_fallthru
          _
        %478 = sfence
        %p479 = pneg %p61
        %p480 = pneg %p58
        %s481 = sand.u32 %s76, 1
        %s482 = scalar_lea.sflag [#allocation3], %s481
        %s483 = sand.u32 %s76, 1
        %s484 = smul.addr %s483, 16
        %s485 = scalar_lea.vmem [#allocation6], %s484
        %p486 = pneg %p89
        %p487 = pneg %p86
        %p488 = scmp.lt.s32.totalorder %s37, 1
        %s489 = scalar_select %p488, %s37, 1
        %p490 = scmp.lt.s32.totalorder %s38, 0
        %s491 = scalar_select %p490, %s38, 0
        %s492 = sadd.s32 %s491, %s489
        %s493 = smul.addr %s492, 8
        %s494 = scalar_lea.vmem %s2, %s493
        %p495 = pneg %p117
        %p496 = pneg %p114
        %s497 = sand.u32 %s33, 1
        %s498 = scalar_lea.sflag [#allocation8], %s497
        %s499 = sand.u32 %s132, 1
        %s500 = smul.addr %s499, 8
        %s501 = scalar_lea.vmem [#allocation7], %s500
        %p502 = pneg %p145
        %p503 = pneg %p142
        %p504 = pneg %p166
        %p505 = pneg %p163
        %p506 = pneg %p187
        %p507 = pneg %p184
        %p508 = pneg %p208
        %p509 = pneg %p205
        %p510 = pneg %p229
        %p511 = pneg %p226
        %p512 = pneg %p250
        %p513 = pneg %p247
        %p514 = pneg %p271
        %p515 = pneg %p268
        %p516 = pneg %p292
        %p517 = pneg %p289
        %p518 = pneg %p320
        %p519 = pneg %p317
        %s520 = sand.u32 %s307, 1
        %s521 = scalar_lea.sflag [#allocation4], %s520
        %s522 = sand.u32 %s307, 1
        %s523 = smul.addr %s522, 16
        %s524 = scalar_lea.vmem [#allocation12], %s523
        %s525 = smul.u32 2, %s38
        %p526 = scmp.lt.s32.totalorder %s37, 1
        %s527 = scalar_select %p526, %s37, 1
        %p528 = scmp.lt.s32.totalorder %s38, 0
        %s529 = scalar_select %p528, %s38, 0
        %s530 = sadd.s32 %s529, %s527
        %s531 = smul.addr %s530, 8
        %s532 = scalar_lea.vmem %s2, %s531
        %s533 = smul.u32 2, %s38
        %s535 = smul.u32 %s38, 16
        %s536 = ssub.s32 %s535, 8
        %v537 = vlaneseq
        %v538 = vshrl.u32 %v537, 7
        %v539 = vadd.s32 %v538, 8
        %v540 = vadd.s32 %v538, 16
        %v541 = vadd.s32 %v538, 24
        %v542 = vstv %s536
        %v543 = vadd.s32 %v542, %v538
        %v544 = vadd.s32 %v542, %v539
        %v545 = vadd.s32 %v542, %v540
        %v546 = vadd.s32 %v542, %v541
        %v547 = vld [vmem:[%s532] sm:$0xff]
        %v548 = vld [vmem:[%s456] sm:$0xff]
        %v549 = vld [vmem:[%s456 + $0x8] sm:$0xff]
        %v550 = vld [vmem:[%s465] sm:$0xff]
        %s551 = sld [smem:[#allocation2]]
        %v552 = vpack.c.bf16 %v548, %v547
        %v553 = vpack.c.bf16 %v550, %v549
        %v554 = vld [vmem:[#allocation9] sm:$0xf]
        %v555 = vld [vmem:[#allocation9 + $0x4] sm:$0xf]
        %v556 = vld [vmem:[#allocation9 + $0x8] sm:$0xf]
        %v557 = vld [vmem:[#allocation9 + $0xc] sm:$0xf]
        %v558 = vld [vmem:[#allocation9 + $0x10] sm:$0xf]
        %v559 = vld [vmem:[#allocation9 + $0x14] sm:$0xf]
        %v560 = vld [vmem:[#allocation9 + $0x18] sm:$0xf]
        %v561 = vld [vmem:[#allocation9 + $0x1c] sm:$0xf]
        %v562 = vld [vmem:[#allocation9 + $0x20] sm:$0xf]
        %v563 = vld [vmem:[#allocation9 + $0x24] sm:$0xf]
        %v564 = vld [vmem:[#allocation9 + $0x28] sm:$0xf]
        %v565 = vld [vmem:[#allocation9 + $0x2c] sm:$0xf]
        %v566 = vld [vmem:[#allocation9 + $0x30] sm:$0xf]
        %v567 = vld [vmem:[#allocation9 + $0x34] sm:$0xf]
        %v568 = vld [vmem:[#allocation9 + $0x38] sm:$0xf]
        %v569 = vld [vmem:[#allocation9 + $0x3c] sm:$0xf]
        %v570 = vld [vmem:[%s5] sm:$0x1]
        %v572 = vlaneseq
        %v573 = vshrl.u32 %v572, 7
        %v574 = vsub.s32 0, %v573
        %v575 = vrot.slane %v570, %v574
        %v593 = vunpack.c.l.b16 %v554
        %v594 = vunpack.c.l.b16 %v555
        %v595 = vunpack.c.l.b16 %v556
        %v596 = vunpack.c.l.b16 %v557
        %v597 = vunpack.c.l.b16 %v558
        %v598 = vunpack.c.l.b16 %v559
        %v599 = vunpack.c.l.b16 %v560
        %v600 = vunpack.c.l.b16 %v561
        %v601 = vunpack.c.l.b16 %v562
        %v602 = vunpack.c.l.b16 %v563
        %v603 = vunpack.c.l.b16 %v564
        %v604 = vunpack.c.l.b16 %v565
        %v605 = vunpack.c.l.b16 %v566
        %v606 = vunpack.c.l.b16 %v567
        %v607 = vunpack.c.l.b16 %v568
        %v608 = vunpack.c.l.b16 %v569
        %v609 = vpack.c.b16 %v594, %v593
        %v610 = vpack.c.b16 %v596, %v595
        %v611 = vpack.c.b16 %v598, %v597
        %v612 = vpack.c.b16 %v600, %v599
        %v613 = vpack.c.b16 %v602, %v601
        %v614 = vpack.c.b16 %v604, %v603
        %v615 = vpack.c.b16 %v606, %v605
        %v616 = vpack.c.b16 %v608, %v607
        %625 = vmatprep.subr.bf16.mxu0 0
        %626 = vmatpush1.bf16.msra.mxu0 %v616
        %627 = vmatprep.subr.bf16.mxu0 0
        %628 = vmatpush1.bf16.msra.mxu0 %v615
        %629 = vmatprep.subr.bf16.mxu0 0
        %630 = vmatpush1.bf16.msra.mxu0 %v614
        %631 = vmatprep.subr.bf16.mxu0 0
        %632 = vmatpush1.bf16.msra.mxu0 %v613
        %633 = vmatprep.subr.bf16.mxu0 0
        %634 = vmatpush1.bf16.msra.mxu0 %v612
        %635 = vmatprep.subr.bf16.mxu0 0
        %636 = vmatpush1.bf16.msra.mxu0 %v611
        %637 = vmatprep.subr.bf16.mxu0 0
        %638 = vmatpush1.bf16.msra.mxu0 %v610
        %639 = vmatprep.subr.bf16.mxu0 0
        %640 = vmatpush1.bf16.msra.mxu0 %v609
        %641 = vmatprep.subr.bf16.mxu0 0
        %642 = vmatpush2.bf16.msra.mxu0 0
        %643 = vmatprep.subr.bf16.mxu0 0
        %644 = vmatpush2.bf16.msra.mxu0 0
        %645 = vmatprep.subr.bf16.mxu0 0
        %646 = vmatpush2.bf16.msra.mxu0 0
        %647 = vmatprep.subr.bf16.mxu0 0
        %648 = vmatpush2.bf16.msra.mxu0 0
        %649 = vmatprep.subr.bf16.mxu0 0
        %650 = vmatpush2.bf16.msra.mxu0 0
        %651 = vmatprep.subr.bf16.mxu0 0
        %652 = vmatpush2.bf16.msra.mxu0 0
        %653 = vmatprep.subr.bf16.mxu0 0
        %654 = vmatpush2.bf16.msra.mxu0 0
        %655 = vmatprep.subr.bf16.mxu0 0
        %656 = vmatpush2.bf16.msra.mxu0 0
        %657 = vmatprep.mubr.bf16.mxu0 0
        %658 = vmatmul.mubr.bf16.gmra.mxu0 %v552
        %v659 = vpop.f32.mrf.mxu0
        %v660 = vadd.f32 %v575, %v659
        %v661 = vpop.f32.mrf.mxu0
        %v662 = vpop.f32.mrf.mxu0
        %v663 = vadd.f32 %v575, %v662
        %v664 = vpop.f32.mrf.mxu0
        %665 = vmatprep.mubr.bf16.mxu0 0
        %666 = vmatmul.mubr.bf16.gmra.mxu0 %v553
        %v667 = vpop.f32.mrf.mxu0
        %v668 = vadd.f32 %v575, %v667
        %v669 = vpop.f32.mrf.mxu0
        %v670 = vpop.f32.mrf.mxu0
        %v671 = vadd.f32 %v575, %v670
        %v672 = vpop.f32.mrf.mxu0
        %673 = vdwg.mxu0
        %vm674 = vcmp.ge.f32.partialorder %v660, 0.0
        %vm675 = vcmp.ge.f32.partialorder %v663, 0.0
        %vm676 = vcmp.ge.f32.partialorder %v668, 0.0
        %vm677 = vcmp.ge.f32.partialorder %v671, 0.0
        %v678 = vstv %s551
        %v679 = vmul.f32 %v678, %v660
        %v680 = vmul.f32 %v678, %v663
        %v681 = vmul.f32 %v678, %v668
        %v682 = vmul.f32 %v678, %v671
        %v683 = vsel %vm674, %v660, %v679
        %v684 = vsel %vm675, %v663, %v680
        %v685 = vsel %vm676, %v668, %v681
        %v686 = vsel %vm677, %v671, %v682
        %687 = vadd.xlane.f32.xlu0 %v683
        %v688 = vpop.xlane.xlu0 %687
        %689 = vadd.xlane.f32.xlu0 %v684
        %v690 = vpop.xlane.xlu0 %689
        %691 = vadd.xlane.f32.xlu0 %v685
        %v692 = vpop.xlane.xlu0 %691
        %693 = vadd.xlane.f32.xlu0 %v686
        %v694 = vpop.xlane.xlu0 %693
        %v695 = vmul.f32 %v688, 0.03125
        %v696 = vmul.f32 %v690, 0.03125
        %v697 = vmul.f32 %v692, 0.03125
        %v698 = vmul.f32 %v694, 0.03125
        %v699 = vmul.f32 %v683, %v683
        %v700 = vmul.f32 %v684, %v684
        %v701 = vmul.f32 %v685, %v685
        %v702 = vmul.f32 %v686, %v686
        %703 = vadd.xlane.f32.xlu0 %v699
        %v704 = vpop.xlane.xlu0 %703
        %705 = vadd.xlane.f32.xlu0 %v700
        %v706 = vpop.xlane.xlu0 %705
        %707 = vadd.xlane.f32.xlu0 %v701
        %v708 = vpop.xlane.xlu0 %707
        %709 = vadd.xlane.f32.xlu0 %v702
        %v710 = vpop.xlane.xlu0 %709
        %v711 = vmul.f32 %v704, 0.03125
        %v712 = vmul.f32 %v706, 0.03125
        %v713 = vmul.f32 %v708, 0.03125
        %v714 = vmul.f32 %v710, 0.03125
        %v715 = vmul.f32 %v695, %v695
        %v716 = vmul.f32 %v696, %v696
        %v717 = vmul.f32 %v697, %v697
        %v718 = vmul.f32 %v698, %v698
        %v719 = vsub.f32 %v711, %v715
        %v720 = vsub.f32 %v712, %v716
        %v721 = vsub.f32 %v713, %v717
        %v722 = vsub.f32 %v714, %v718
        %v723 = vmax.f32 %v719, 0.0
        %v724 = vmax.f32 %v720, 0.0
        %v725 = vmax.f32 %v721, 0.0
        %v726 = vmax.f32 %v722, 0.0
        %v727 = vsub.f32 %v683, %v695
        %v728 = vsub.f32 %v684, %v696
        %v729 = vsub.f32 %v685, %v697
        %v730 = vsub.f32 %v686, %v698
        %v731 = vadd.f32 %v723, 1e-05
        %v732 = vadd.f32 %v724, 1e-05
        %v733 = vadd.f32 %v725, 1e-05
        %v734 = vadd.f32 %v726, 1e-05
        %v735 = vrsqrt.pop %v731
        %v736 = vrsqrt.pop %v732
        %v737 = vrsqrt.pop %v733
        %v738 = vrsqrt.pop %v734
        %v739 = vmul.f32 %v727, %v735
        %v740 = vmul.f32 %v728, %v736
        %v741 = vmul.f32 %v729, %v737
        %v742 = vmul.f32 %v730, %v738
        %v743 = vld [vmem:[%s6] sm:$0x1]
        %v745 = vlaneseq
        %v746 = vshrl.u32 %v745, 7
        %v747 = vsub.s32 0, %v746
        %v748 = vrot.slane %v743, %v747
        %v750 = vadd.f32 %v739, %v748
        %v751 = vadd.f32 %v740, %v748
        %v752 = vadd.f32 %v741, %v748
        %v753 = vadd.f32 %v742, %v748
        %v754 = vld [vmem:[%s7] sm:$0x7]
        %vm755 = vcmp.ge.s32.totalorder %v543, 1
        %vm756 = vcmp.ge.s32.totalorder %v544, 1
        %vm757 = vcmp.ge.s32.totalorder %v545, 1
        %vm758 = vcmp.ge.s32.totalorder %v546, 1
        %v759 = vrot.slane %v750, 7
        %v760 = vrot.slane %v751, 7
        %v761 = vrot.slane %v752, 7
        %v762 = vrot.slane %v753, 7
        %vm763 = vcmp.lt.s32.totalorder %v538, 1
        %v764 = vsel %vm763, %v761, %v762
        %v765 = vsel %vm763, %v760, %v761
        %v766 = vsel %vm763, %v759, %v760
        %v767 = vsel %vm763, %v762, %v759
        %v768 = vsel %vm755, 1, 0
        %v769 = vsel %vm756, 1, 0
        %v770 = vsel %vm757, 1, 0
        %v771 = vsel %vm758, 1, 0
        %vm772 = vcmp.eq.s32.totalorder %v768, 1
        %vm773 = vcmp.eq.s32.totalorder %v769, 1
        %vm774 = vcmp.eq.s32.totalorder %v770, 1
        %vm775 = vcmp.eq.s32.totalorder %v771, 1
        %v776 = vsel %vm772, %v767, 0.0
        %v777 = vsel %vm773, %v766, 0.0
        %v778 = vsel %vm774, %v765, 0.0
        %v779 = vsel %vm775, %v764, 0.0
        %vm780 = vcmp.lt.s32.totalorder %v543, 15
        %vm781 = vcmp.lt.s32.totalorder %v544, 15
        %vm782 = vcmp.lt.s32.totalorder %v545, 15
        %vm783 = vcmp.lt.s32.totalorder %v546, 15
        %v784 = vrot.slane %v750, 1
        %v785 = vrot.slane %v751, 1
        %v786 = vrot.slane %v752, 1
        %v787 = vrot.slane %v753, 1
        %vm788 = vcmp.lt.s32.totalorder %v538, 7
        %v789 = vsel %vm788, %v786, %v787
        %v790 = vsel %vm788, %v785, %v786
        %v791 = vsel %vm788, %v784, %v785
        %v792 = vsel %vm788, %v787, %v784
        %v793 = vsel %vm780, 1, 0
        %v794 = vsel %vm781, 1, 0
        %v795 = vsel %vm782, 1, 0
        %v796 = vsel %vm783, 1, 0
        %vm797 = vcmp.eq.s32.totalorder %v793, 1
        %vm798 = vcmp.eq.s32.totalorder %v794, 1
        %vm799 = vcmp.eq.s32.totalorder %v795, 1
        %vm800 = vcmp.eq.s32.totalorder %v796, 1
        %v801 = vsel %vm797, %v791, 0.0
        %v802 = vsel %vm798, %v790, 0.0
        %v803 = vsel %vm799, %v789, 0.0
        %v804 = vsel %vm800, %v792, 0.0
        %v805 = vlaneseq
        %v806 = vshrl.u32 %v805, 7
        %v807 = vsub.s32 0, %v806
        %v808 = vrot.slane %v754, %v807
        %v809 = vmul.f32 %v776, %v808
        %v810 = vmul.f32 %v777, %v808
        %v811 = vmul.f32 %v778, %v808
        %v812 = vmul.f32 %v779, %v808
        %v813 = vlaneseq
        %v814 = vshrl.u32 %v813, 7
        %v815 = vsub.s32 1, %v814
        %v816 = vrot.slane %v754, %v815
        %v817 = vmul.f32 %v750, %v816
        %v818 = vmul.f32 %v751, %v816
        %v819 = vmul.f32 %v752, %v816
        %v820 = vmul.f32 %v753, %v816
        %v821 = vadd.f32 %v809, %v817
        %v822 = vadd.f32 %v810, %v818
        %v823 = vadd.f32 %v811, %v819
        %v824 = vadd.f32 %v812, %v820
        %v825 = vlaneseq
        %v826 = vshrl.u32 %v825, 7
        %v827 = vsub.s32 2, %v826
        %v828 = vrot.slane %v754, %v827
        %v829 = vmul.f32 %v801, %v828
        %v830 = vmul.f32 %v802, %v828
        %v831 = vmul.f32 %v803, %v828
        %v832 = vmul.f32 %v804, %v828
        %v833 = vadd.f32 %v821, %v829
        %v834 = vadd.f32 %v822, %v830
        %v835 = vadd.f32 %v823, %v831
        %v836 = vadd.f32 %v824, %v832
        %v837 = vld [vmem:[%s8] sm:$0x1]
        %v839 = vlaneseq
        %v840 = vshrl.u32 %v839, 7
        %v841 = vsub.s32 0, %v840
        %v842 = vrot.slane %v837, %v841
        %v844 = vadd.f32 %v833, %v842
        %v845 = vadd.f32 %v834, %v842
        %v846 = vadd.f32 %v835, %v842
        %v847 = vadd.f32 %v836, %v842
        %vm848 = vcmp.ge.f32.partialorder %v844, 0.0
        %vm849 = vcmp.ge.f32.partialorder %v845, 0.0
        %vm850 = vcmp.ge.f32.partialorder %v846, 0.0
        %vm851 = vcmp.ge.f32.partialorder %v847, 0.0
        %v852 = vmul.f32 %v678, %v844
        %v853 = vmul.f32 %v678, %v845
        %v854 = vmul.f32 %v678, %v846
        %v855 = vmul.f32 %v678, %v847
        %v856 = vsel %vm848, %v844, %v852
        %v857 = vsel %vm849, %v845, %v853
        %v858 = vsel %vm850, %v846, %v854
        %v859 = vsel %vm851, %v847, %v855
        %v860 = vpack.c.bf16 %v857, %v856
        %v861 = vpack.c.bf16 %v859, %v858
        %v862 = vld [vmem:[#allocation10] sm:$0xf]
        %v863 = vld [vmem:[#allocation10 + $0x4] sm:$0xf]
        %v864 = vld [vmem:[#allocation10 + $0x8] sm:$0xf]
        %v865 = vld [vmem:[#allocation10 + $0xc] sm:$0xf]
        %v866 = vld [vmem:[#allocation10 + $0x10] sm:$0xf]
        %v867 = vld [vmem:[#allocation10 + $0x14] sm:$0xf]
        %v868 = vld [vmem:[#allocation10 + $0x18] sm:$0xf]
        %v869 = vld [vmem:[#allocation10 + $0x1c] sm:$0xf]
        %v870 = vld [vmem:[#allocation10 + $0x20] sm:$0xf]
        %v871 = vld [vmem:[#allocation10 + $0x24] sm:$0xf]
        %v872 = vld [vmem:[#allocation10 + $0x28] sm:$0xf]
        %v873 = vld [vmem:[#allocation10 + $0x2c] sm:$0xf]
        %v874 = vld [vmem:[#allocation10 + $0x30] sm:$0xf]
        %v875 = vld [vmem:[#allocation10 + $0x34] sm:$0xf]
        %v876 = vld [vmem:[#allocation10 + $0x38] sm:$0xf]
        %v877 = vld [vmem:[#allocation10 + $0x3c] sm:$0xf]
        %v878 = vld [vmem:[%s10] sm:$0x1]
        %v880 = vlaneseq
        %v881 = vshrl.u32 %v880, 7
        %v882 = vsub.s32 0, %v881
        %v883 = vrot.slane %v878, %v882
        %v901 = vunpack.c.l.b16 %v862
        %v902 = vunpack.c.l.b16 %v863
        %v903 = vunpack.c.l.b16 %v864
        %v904 = vunpack.c.l.b16 %v865
        %v905 = vunpack.c.l.b16 %v866
        %v906 = vunpack.c.l.b16 %v867
        %v907 = vunpack.c.l.b16 %v868
        %v908 = vunpack.c.l.b16 %v869
        %v909 = vunpack.c.l.b16 %v870
        %v910 = vunpack.c.l.b16 %v871
        %v911 = vunpack.c.l.b16 %v872
        %v912 = vunpack.c.l.b16 %v873
        %v913 = vunpack.c.l.b16 %v874
        %v914 = vunpack.c.l.b16 %v875
        %v915 = vunpack.c.l.b16 %v876
        %v916 = vunpack.c.l.b16 %v877
        %v917 = vpack.c.b16 %v902, %v901
        %v918 = vpack.c.b16 %v904, %v903
        %v919 = vpack.c.b16 %v906, %v905
        %v920 = vpack.c.b16 %v908, %v907
        %v921 = vpack.c.b16 %v910, %v909
        %v922 = vpack.c.b16 %v912, %v911
        %v923 = vpack.c.b16 %v914, %v913
        %v924 = vpack.c.b16 %v916, %v915
        %933 = vmatprep.subr.bf16.mxu0 0
        %934 = vmatpush1.bf16.msra.mxu0 %v924
        %935 = vmatprep.subr.bf16.mxu0 0
        %936 = vmatpush1.bf16.msra.mxu0 %v923
        %937 = vmatprep.subr.bf16.mxu0 0
        %938 = vmatpush1.bf16.msra.mxu0 %v922
        %939 = vmatprep.subr.bf16.mxu0 0
        %940 = vmatpush1.bf16.msra.mxu0 %v921
        %941 = vmatprep.subr.bf16.mxu0 0
        %942 = vmatpush1.bf16.msra.mxu0 %v920
        %943 = vmatprep.subr.bf16.mxu0 0
        %944 = vmatpush1.bf16.msra.mxu0 %v919
        %945 = vmatprep.subr.bf16.mxu0 0
        %946 = vmatpush1.bf16.msra.mxu0 %v918
        %947 = vmatprep.subr.bf16.mxu0 0
        %948 = vmatpush1.bf16.msra.mxu0 %v917
        %949 = vmatprep.subr.bf16.mxu0 0
        %950 = vmatpush2.bf16.msra.mxu0 0
        %951 = vmatprep.subr.bf16.mxu0 0
        %952 = vmatpush2.bf16.msra.mxu0 0
        %953 = vmatprep.subr.bf16.mxu0 0
        %954 = vmatpush2.bf16.msra.mxu0 0
        %955 = vmatprep.subr.bf16.mxu0 0
        %956 = vmatpush2.bf16.msra.mxu0 0
        %957 = vmatprep.subr.bf16.mxu0 0
        %958 = vmatpush2.bf16.msra.mxu0 0
        %959 = vmatprep.subr.bf16.mxu0 0
        %960 = vmatpush2.bf16.msra.mxu0 0
        %961 = vmatprep.subr.bf16.mxu0 0
        %962 = vmatpush2.bf16.msra.mxu0 0
        %963 = vmatprep.subr.bf16.mxu0 0
        %964 = vmatpush2.bf16.msra.mxu0 0
        %965 = vmatprep.mubr.bf16.mxu0 0
        %966 = vmatmul.mubr.bf16.gmra.mxu0 %v860
        %v967 = vpop.f32.mrf.mxu0
        %v968 = vadd.f32 %v883, %v967
        %v969 = vpop.f32.mrf.mxu0
        %v970 = vpop.f32.mrf.mxu0
        %v971 = vadd.f32 %v883, %v970
        %v972 = vpop.f32.mrf.mxu0
        %973 = vmatprep.mubr.bf16.mxu0 0
        %974 = vmatmul.mubr.bf16.gmra.mxu0 %v861
        %v975 = vpop.f32.mrf.mxu0
        %v976 = vadd.f32 %v883, %v975
        %v977 = vpop.f32.mrf.mxu0
        %v978 = vpop.f32.mrf.mxu0
        %v979 = vadd.f32 %v883, %v978
        %v980 = vpop.f32.mrf.mxu0
        %981 = vdwg.mxu0
        %v982 = vadd.f32 %v547, %v968
        %v983 = vadd.f32 %v548, %v971
        %v984 = vadd.f32 %v549, %v976
        %v985 = vadd.f32 %v550, %v979
        %s986 = sld [smem:[#allocation2 + $0x1]]
        %v987 = vpack.c.bf16 %v983, %v982
        %v988 = vpack.c.bf16 %v985, %v984
        %s989 = scalar_lea.vmem [#allocation9], 64
        %v990 = vld [vmem:[%s989] sm:$0xf]
        %v991 = vld [vmem:[%s989 + $0x4] sm:$0xf]
        %v992 = vld [vmem:[%s989 + $0x8] sm:$0xf]
        %v993 = vld [vmem:[%s989 + $0xc] sm:$0xf]
        %v994 = vld [vmem:[%s989 + $0x10] sm:$0xf]
        %v995 = vld [vmem:[%s989 + $0x14] sm:$0xf]
        %v996 = vld [vmem:[%s989 + $0x18] sm:$0xf]
        %v997 = vld [vmem:[%s989 + $0x1c] sm:$0xf]
        %v998 = vld [vmem:[%s989 + $0x20] sm:$0xf]
        %v999 = vld [vmem:[%s989 + $0x24] sm:$0xf]
        %v1000 = vld [vmem:[%s989 + $0x28] sm:$0xf]
        %v1001 = vld [vmem:[%s989 + $0x2c] sm:$0xf]
        %v1002 = vld [vmem:[%s989 + $0x30] sm:$0xf]
        %v1003 = vld [vmem:[%s989 + $0x34] sm:$0xf]
        %v1004 = vld [vmem:[%s989 + $0x38] sm:$0xf]
        %v1005 = vld [vmem:[%s989 + $0x3c] sm:$0xf]
        %s1006 = scalar_lea.vmem %s5, 1
        %v1007 = vld [vmem:[%s1006] sm:$0x1]
        %v1009 = vlaneseq
        %v1010 = vshrl.u32 %v1009, 7
        %v1011 = vsub.s32 0, %v1010
        %v1012 = vrot.slane %v1007, %v1011
        %v1030 = vunpack.c.l.b16 %v990
        %v1031 = vunpack.c.l.b16 %v991
        %v1032 = vunpack.c.l.b16 %v992
        %v1033 = vunpack.c.l.b16 %v993
        %v1034 = vunpack.c.l.b16 %v994
        %v1035 = vunpack.c.l.b16 %v995
        %v1036 = vunpack.c.l.b16 %v996
        %v1037 = vunpack.c.l.b16 %v997
        %v1038 = vunpack.c.l.b16 %v998
        %v1039 = vunpack.c.l.b16 %v999
        %v1040 = vunpack.c.l.b16 %v1000
        %v1041 = vunpack.c.l.b16 %v1001
        %v1042 = vunpack.c.l.b16 %v1002
        %v1043 = vunpack.c.l.b16 %v1003
        %v1044 = vunpack.c.l.b16 %v1004
        %v1045 = vunpack.c.l.b16 %v1005
        %v1046 = vpack.c.b16 %v1031, %v1030
        %v1047 = vpack.c.b16 %v1033, %v1032
        %v1048 = vpack.c.b16 %v1035, %v1034
        %v1049 = vpack.c.b16 %v1037, %v1036
        %v1050 = vpack.c.b16 %v1039, %v1038
        %v1051 = vpack.c.b16 %v1041, %v1040
        %v1052 = vpack.c.b16 %v1043, %v1042
        %v1053 = vpack.c.b16 %v1045, %v1044
        %1062 = vmatprep.subr.bf16.mxu0 0
        %1063 = vmatpush1.bf16.msra.mxu0 %v1053
        %1064 = vmatprep.subr.bf16.mxu0 0
        %1065 = vmatpush1.bf16.msra.mxu0 %v1052
        %1066 = vmatprep.subr.bf16.mxu0 0
        %1067 = vmatpush1.bf16.msra.mxu0 %v1051
        %1068 = vmatprep.subr.bf16.mxu0 0
        %1069 = vmatpush1.bf16.msra.mxu0 %v1050
        %1070 = vmatprep.subr.bf16.mxu0 0
        %1071 = vmatpush1.bf16.msra.mxu0 %v1049
        %1072 = vmatprep.subr.bf16.mxu0 0
        %1073 = vmatpush1.bf16.msra.mxu0 %v1048
        %1074 = vmatprep.subr.bf16.mxu0 0
        %1075 = vmatpush1.bf16.msra.mxu0 %v1047
        %1076 = vmatprep.subr.bf16.mxu0 0
        %1077 = vmatpush1.bf16.msra.mxu0 %v1046
        %1078 = vmatprep.subr.bf16.mxu0 0
        %1079 = vmatpush2.bf16.msra.mxu0 0
        %1080 = vmatprep.subr.bf16.mxu0 0
        %1081 = vmatpush2.bf16.msra.mxu0 0
        %1082 = vmatprep.subr.bf16.mxu0 0
        %1083 = vmatpush2.bf16.msra.mxu0 0
        %1084 = vmatprep.subr.bf16.mxu0 0
        %1085 = vmatpush2.bf16.msra.mxu0 0
        %1086 = vmatprep.subr.bf16.mxu0 0
        %1087 = vmatpush2.bf16.msra.mxu0 0
        %1088 = vmatprep.subr.bf16.mxu0 0
        %1089 = vmatpush2.bf16.msra.mxu0 0
        %1090 = vmatprep.subr.bf16.mxu0 0
        %1091 = vmatpush2.bf16.msra.mxu0 0
        %1092 = vmatprep.subr.bf16.mxu0 0
        %1093 = vmatpush2.bf16.msra.mxu0 0
        %1094 = vmatprep.mubr.bf16.mxu0 0
        %1095 = vmatmul.mubr.bf16.gmra.mxu0 %v987
        %v1096 = vpop.f32.mrf.mxu0
        %v1097 = vadd.f32 %v1012, %v1096
        %v1098 = vpop.f32.mrf.mxu0
        %v1099 = vpop.f32.mrf.mxu0
        %v1100 = vadd.f32 %v1012, %v1099
        %v1101 = vpop.f32.mrf.mxu0
        %1102 = vmatprep.mubr.bf16.mxu0 0
        %1103 = vmatmul.mubr.bf16.gmra.mxu0 %v988
        %v1104 = vpop.f32.mrf.mxu0
        %v1105 = vadd.f32 %v1012, %v1104
        %v1106 = vpop.f32.mrf.mxu0
        %v1107 = vpop.f32.mrf.mxu0
        %v1108 = vadd.f32 %v1012, %v1107
        %v1109 = vpop.f32.mrf.mxu0
        %1110 = vdwg.mxu0
        %vm1111 = vcmp.ge.f32.partialorder %v1097, 0.0
        %vm1112 = vcmp.ge.f32.partialorder %v1100, 0.0
        %vm1113 = vcmp.ge.f32.partialorder %v1105, 0.0
        %vm1114 = vcmp.ge.f32.partialorder %v1108, 0.0
        %v1115 = vstv %s986
        %v1116 = vmul.f32 %v1115, %v1097
        %v1117 = vmul.f32 %v1115, %v1100
        %v1118 = vmul.f32 %v1115, %v1105
        %v1119 = vmul.f32 %v1115, %v1108
        %v1120 = vsel %vm1111, %v1097, %v1116
        %v1121 = vsel %vm1112, %v1100, %v1117
        %v1122 = vsel %vm1113, %v1105, %v1118
        %v1123 = vsel %vm1114, %v1108, %v1119
        %1124 = vadd.xlane.f32.xlu0 %v1120
        %v1125 = vpop.xlane.xlu0 %1124
        %1126 = vadd.xlane.f32.xlu0 %v1121
        %v1127 = vpop.xlane.xlu0 %1126
        %1128 = vadd.xlane.f32.xlu0 %v1122
        %v1129 = vpop.xlane.xlu0 %1128
        %1130 = vadd.xlane.f32.xlu0 %v1123
        %v1131 = vpop.xlane.xlu0 %1130
        %v1132 = vmul.f32 %v1125, 0.03125
        %v1133 = vmul.f32 %v1127, 0.03125
        %v1134 = vmul.f32 %v1129, 0.03125
        %v1135 = vmul.f32 %v1131, 0.03125
        %v1136 = vmul.f32 %v1120, %v1120
        %v1137 = vmul.f32 %v1121, %v1121
        %v1138 = vmul.f32 %v1122, %v1122
        %v1139 = vmul.f32 %v1123, %v1123
        %1140 = vadd.xlane.f32.xlu0 %v1136
        %v1141 = vpop.xlane.xlu0 %1140
        %1142 = vadd.xlane.f32.xlu0 %v1137
        %v1143 = vpop.xlane.xlu0 %1142
        %1144 = vadd.xlane.f32.xlu0 %v1138
        %v1145 = vpop.xlane.xlu0 %1144
        %1146 = vadd.xlane.f32.xlu0 %v1139
        %v1147 = vpop.xlane.xlu0 %1146
        %v1148 = vmul.f32 %v1141, 0.03125
        %v1149 = vmul.f32 %v1143, 0.03125
        %v1150 = vmul.f32 %v1145, 0.03125
        %v1151 = vmul.f32 %v1147, 0.03125
        %v1152 = vmul.f32 %v1132, %v1132
        %v1153 = vmul.f32 %v1133, %v1133
        %v1154 = vmul.f32 %v1134, %v1134
        %v1155 = vmul.f32 %v1135, %v1135
        %v1156 = vsub.f32 %v1148, %v1152
        %v1157 = vsub.f32 %v1149, %v1153
        %v1158 = vsub.f32 %v1150, %v1154
        %v1159 = vsub.f32 %v1151, %v1155
        %v1160 = vmax.f32 %v1156, 0.0
        %v1161 = vmax.f32 %v1157, 0.0
        %v1162 = vmax.f32 %v1158, 0.0
        %v1163 = vmax.f32 %v1159, 0.0
        %v1164 = vsub.f32 %v1120, %v1132
        %v1165 = vsub.f32 %v1121, %v1133
        %v1166 = vsub.f32 %v1122, %v1134
        %v1167 = vsub.f32 %v1123, %v1135
        %v1168 = vadd.f32 %v1160, 1e-05
        %v1169 = vadd.f32 %v1161, 1e-05
        %v1170 = vadd.f32 %v1162, 1e-05
        %v1171 = vadd.f32 %v1163, 1e-05
        %v1172 = vrsqrt.pop %v1168
        %v1173 = vrsqrt.pop %v1169
        %v1174 = vrsqrt.pop %v1170
        %v1175 = vrsqrt.pop %v1171
        %v1176 = vmul.f32 %v1164, %v1172
        %v1177 = vmul.f32 %v1165, %v1173
        %v1178 = vmul.f32 %v1166, %v1174
        %v1179 = vmul.f32 %v1167, %v1175
        %s1180 = scalar_lea.vmem %s6, 1
        %v1181 = vld [vmem:[%s1180] sm:$0x1]
        %v1183 = vlaneseq
        %v1184 = vshrl.u32 %v1183, 7
        %v1185 = vsub.s32 0, %v1184
        %v1186 = vrot.slane %v1181, %v1185
        %v1188 = vadd.f32 %v1176, %v1186
        %v1189 = vadd.f32 %v1177, %v1186
        %v1190 = vadd.f32 %v1178, %v1186
        %v1191 = vadd.f32 %v1179, %v1186
        %s1192 = scalar_lea.vmem %s7, 4
        %v1193 = vld [vmem:[%s1192] sm:$0x7]
        %vm1194 = vcmp.ge.s32.totalorder %v543, 2
        %vm1195 = vcmp.ge.s32.totalorder %v544, 2
        %vm1196 = vcmp.ge.s32.totalorder %v545, 2
        %vm1197 = vcmp.ge.s32.totalorder %v546, 2
        %v1198 = vrot.slane %v1188, 6
        %v1199 = vrot.slane %v1189, 6
        %v1200 = vrot.slane %v1190, 6
        %v1201 = vrot.slane %v1191, 6
        %vm1202 = vcmp.lt.s32.totalorder %v538, 2
        %v1203 = vsel %vm1202, %v1200, %v1201
        %v1204 = vsel %vm1202, %v1199, %v1200
        %v1205 = vsel %vm1202, %v1198, %v1199
        %v1206 = vsel %vm1202, %v1201, %v1198
        %v1207 = vsel %vm1194, 1, 0
        %v1208 = vsel %vm1195, 1, 0
        %v1209 = vsel %vm1196, 1, 0
        %v1210 = vsel %vm1197, 1, 0
        %vm1211 = vcmp.eq.s32.totalorder %v1207, 1
        %vm1212 = vcmp.eq.s32.totalorder %v1208, 1
        %vm1213 = vcmp.eq.s32.totalorder %v1209, 1
        %vm1214 = vcmp.eq.s32.totalorder %v1210, 1
        %v1215 = vsel %vm1211, %v1206, 0.0
        %v1216 = vsel %vm1212, %v1205, 0.0
        %v1217 = vsel %vm1213, %v1204, 0.0
        %v1218 = vsel %vm1214, %v1203, 0.0
        %vm1219 = vcmp.lt.s32.totalorder %v543, 14
        %vm1220 = vcmp.lt.s32.totalorder %v544, 14
        %vm1221 = vcmp.lt.s32.totalorder %v545, 14
        %vm1222 = vcmp.lt.s32.totalorder %v546, 14
        %v1223 = vrot.slane %v1188, 2
        %v1224 = vrot.slane %v1189, 2
        %v1225 = vrot.slane %v1190, 2
        %v1226 = vrot.slane %v1191, 2
        %vm1227 = vcmp.lt.s32.totalorder %v538, 6
        %v1228 = vsel %vm1227, %v1225, %v1226
        %v1229 = vsel %vm1227, %v1224, %v1225
        %v1230 = vsel %vm1227, %v1223, %v1224
        %v1231 = vsel %vm1227, %v1226, %v1223
        %v1232 = vsel %vm1219, 1, 0
        %v1233 = vsel %vm1220, 1, 0
        %v1234 = vsel %vm1221, 1, 0
        %v1235 = vsel %vm1222, 1, 0
        %vm1236 = vcmp.eq.s32.totalorder %v1232, 1
        %vm1237 = vcmp.eq.s32.totalorder %v1233, 1
        %vm1238 = vcmp.eq.s32.totalorder %v1234, 1
        %vm1239 = vcmp.eq.s32.totalorder %v1235, 1
        %v1240 = vsel %vm1236, %v1230, 0.0
        %v1241 = vsel %vm1237, %v1229, 0.0
        %v1242 = vsel %vm1238, %v1228, 0.0
        %v1243 = vsel %vm1239, %v1231, 0.0
        %v1244 = vlaneseq
        %v1245 = vshrl.u32 %v1244, 7
        %v1246 = vsub.s32 0, %v1245
        %v1247 = vrot.slane %v1193, %v1246
        %v1248 = vmul.f32 %v1215, %v1247
        %v1249 = vmul.f32 %v1216, %v1247
        %v1250 = vmul.f32 %v1217, %v1247
        %v1251 = vmul.f32 %v1218, %v1247
        %v1252 = vlaneseq
        %v1253 = vshrl.u32 %v1252, 7
        %v1254 = vsub.s32 1, %v1253
        %v1255 = vrot.slane %v1193, %v1254
        %v1256 = vmul.f32 %v1188, %v1255
        %v1257 = vmul.f32 %v1189, %v1255
        %v1258 = vmul.f32 %v1190, %v1255
        %v1259 = vmul.f32 %v1191, %v1255
        %v1260 = vadd.f32 %v1248, %v1256
        %v1261 = vadd.f32 %v1249, %v1257
        %v1262 = vadd.f32 %v1250, %v1258
        %v1263 = vadd.f32 %v1251, %v1259
        %v1264 = vlaneseq
        %v1265 = vshrl.u32 %v1264, 7
        %v1266 = vsub.s32 2, %v1265
        %v1267 = vrot.slane %v1193, %v1266
        %v1268 = vmul.f32 %v1240, %v1267
        %v1269 = vmul.f32 %v1241, %v1267
        %v1270 = vmul.f32 %v1242, %v1267
        %v1271 = vmul.f32 %v1243, %v1267
        %v1272 = vadd.f32 %v1260, %v1268
        %v1273 = vadd.f32 %v1261, %v1269
        %v1274 = vadd.f32 %v1262, %v1270
        %v1275 = vadd.f32 %v1263, %v1271
        %s1276 = scalar_lea.vmem %s8, 1
        %v1277 = vld [vmem:[%s1276] sm:$0x1]
        %v1279 = vlaneseq
        %v1280 = vshrl.u32 %v1279, 7
        %v1281 = vsub.s32 0, %v1280
        %v1282 = vrot.slane %v1277, %v1281
        %v1284 = vadd.f32 %v1272, %v1282
        %v1285 = vadd.f32 %v1273, %v1282
        %v1286 = vadd.f32 %v1274, %v1282
        %v1287 = vadd.f32 %v1275, %v1282
        %vm1288 = vcmp.ge.f32.partialorder %v1284, 0.0
        %vm1289 = vcmp.ge.f32.partialorder %v1285, 0.0
        %vm1290 = vcmp.ge.f32.partialorder %v1286, 0.0
        %vm1291 = vcmp.ge.f32.partialorder %v1287, 0.0
        %v1292 = vmul.f32 %v1115, %v1284
        %v1293 = vmul.f32 %v1115, %v1285
        %v1294 = vmul.f32 %v1115, %v1286
        %v1295 = vmul.f32 %v1115, %v1287
        %v1296 = vsel %vm1288, %v1284, %v1292
        %v1297 = vsel %vm1289, %v1285, %v1293
        %v1298 = vsel %vm1290, %v1286, %v1294
        %v1299 = vsel %vm1291, %v1287, %v1295
        %v1300 = vpack.c.bf16 %v1297, %v1296
        %v1301 = vpack.c.bf16 %v1299, %v1298
        %s1302 = scalar_lea.vmem [#allocation10], 64
        %v1303 = vld [vmem:[%s1302] sm:$0xf]
        %v1304 = vld [vmem:[%s1302 + $0x4] sm:$0xf]
        %v1305 = vld [vmem:[%s1302 + $0x8] sm:$0xf]
        %v1306 = vld [vmem:[%s1302 + $0xc] sm:$0xf]
        %v1307 = vld [vmem:[%s1302 + $0x10] sm:$0xf]
        %v1308 = vld [vmem:[%s1302 + $0x14] sm:$0xf]
        %v1309 = vld [vmem:[%s1302 + $0x18] sm:$0xf]
        %v1310 = vld [vmem:[%s1302 + $0x1c] sm:$0xf]
        %v1311 = vld [vmem:[%s1302 + $0x20] sm:$0xf]
        %v1312 = vld [vmem:[%s1302 + $0x24] sm:$0xf]
        %v1313 = vld [vmem:[%s1302 + $0x28] sm:$0xf]
        %v1314 = vld [vmem:[%s1302 + $0x2c] sm:$0xf]
        %v1315 = vld [vmem:[%s1302 + $0x30] sm:$0xf]
        %v1316 = vld [vmem:[%s1302 + $0x34] sm:$0xf]
        %v1317 = vld [vmem:[%s1302 + $0x38] sm:$0xf]
        %v1318 = vld [vmem:[%s1302 + $0x3c] sm:$0xf]
        %s1319 = scalar_lea.vmem %s10, 1
        %v1320 = vld [vmem:[%s1319] sm:$0x1]
        %v1322 = vlaneseq
        %v1323 = vshrl.u32 %v1322, 7
        %v1324 = vsub.s32 0, %v1323
        %v1325 = vrot.slane %v1320, %v1324
        %v1343 = vunpack.c.l.b16 %v1303
        %v1344 = vunpack.c.l.b16 %v1304
        %v1345 = vunpack.c.l.b16 %v1305
        %v1346 = vunpack.c.l.b16 %v1306
        %v1347 = vunpack.c.l.b16 %v1307
        %v1348 = vunpack.c.l.b16 %v1308
        %v1349 = vunpack.c.l.b16 %v1309
        %v1350 = vunpack.c.l.b16 %v1310
        %v1351 = vunpack.c.l.b16 %v1311
        %v1352 = vunpack.c.l.b16 %v1312
        %v1353 = vunpack.c.l.b16 %v1313
        %v1354 = vunpack.c.l.b16 %v1314
        %v1355 = vunpack.c.l.b16 %v1315
        %v1356 = vunpack.c.l.b16 %v1316
        %v1357 = vunpack.c.l.b16 %v1317
        %v1358 = vunpack.c.l.b16 %v1318
        %v1359 = vpack.c.b16 %v1344, %v1343
        %v1360 = vpack.c.b16 %v1346, %v1345
        %v1361 = vpack.c.b16 %v1348, %v1347
        %v1362 = vpack.c.b16 %v1350, %v1349
        %v1363 = vpack.c.b16 %v1352, %v1351
        %v1364 = vpack.c.b16 %v1354, %v1353
        %v1365 = vpack.c.b16 %v1356, %v1355
        %v1366 = vpack.c.b16 %v1358, %v1357
        %1375 = vmatprep.subr.bf16.mxu0 0
        %1376 = vmatpush1.bf16.msra.mxu0 %v1366
        %1377 = vmatprep.subr.bf16.mxu0 0
        %1378 = vmatpush1.bf16.msra.mxu0 %v1365
        %1379 = vmatprep.subr.bf16.mxu0 0
        %1380 = vmatpush1.bf16.msra.mxu0 %v1364
        %1381 = vmatprep.subr.bf16.mxu0 0
        %1382 = vmatpush1.bf16.msra.mxu0 %v1363
        %1383 = vmatprep.subr.bf16.mxu0 0
        %1384 = vmatpush1.bf16.msra.mxu0 %v1362
        %1385 = vmatprep.subr.bf16.mxu0 0
        %1386 = vmatpush1.bf16.msra.mxu0 %v1361
        %1387 = vmatprep.subr.bf16.mxu0 0
        %1388 = vmatpush1.bf16.msra.mxu0 %v1360
        %1389 = vmatprep.subr.bf16.mxu0 0
        %1390 = vmatpush1.bf16.msra.mxu0 %v1359
        %1391 = vmatprep.subr.bf16.mxu0 0
        %1392 = vmatpush2.bf16.msra.mxu0 0
        %1393 = vmatprep.subr.bf16.mxu0 0
        %1394 = vmatpush2.bf16.msra.mxu0 0
        %1395 = vmatprep.subr.bf16.mxu0 0
        %1396 = vmatpush2.bf16.msra.mxu0 0
        %1397 = vmatprep.subr.bf16.mxu0 0
        %1398 = vmatpush2.bf16.msra.mxu0 0
        %1399 = vmatprep.subr.bf16.mxu0 0
        %1400 = vmatpush2.bf16.msra.mxu0 0
        %1401 = vmatprep.subr.bf16.mxu0 0
        %1402 = vmatpush2.bf16.msra.mxu0 0
        %1403 = vmatprep.subr.bf16.mxu0 0
        %1404 = vmatpush2.bf16.msra.mxu0 0
        %1405 = vmatprep.subr.bf16.mxu0 0
        %1406 = vmatpush2.bf16.msra.mxu0 0
        %1407 = vmatprep.mubr.bf16.mxu0 0
        %1408 = vmatmul.mubr.bf16.gmra.mxu0 %v1300
        %v1409 = vpop.f32.mrf.mxu0
        %v1410 = vpop.f32.mrf.mxu0
        %v1411 = vpop.f32.mrf.mxu0
        %v1412 = vadd.f32 %v1325, %v1411
        %v1413 = vpop.f32.mrf.mxu0
        %1414 = vmatprep.mubr.bf16.mxu0 0
        %1415 = vmatmul.mubr.bf16.gmra.mxu0 %v1301
        %v1416 = vpop.f32.mrf.mxu0
        %v1417 = vadd.f32 %v1325, %v1416
        %v1418 = vpop.f32.mrf.mxu0
        %v1419 = vpop.f32.mrf.mxu0
        %v1420 = vpop.f32.mrf.mxu0
        %1421 = vdwg.mxu0
        %v1422 = vadd.f32 %v983, %v1412
        %v1423 = vadd.f32 %v984, %v1417
        %1424 = vst [vmem:[%s524] sm:$0xff] %v1422
        %1425 = vst [vmem:[%s524 + $0x8] sm:$0xff] %v1423
        %s1426 = sand.u32 %s307, 1
        %s1427 = scalar_lea.sflag [#allocation4], %s1426
        %s1428 = sand.u32 %s307, 1
        %s1429 = smul.addr %s1428, 16
        %s1430 = scalar_lea.vmem [#allocation12], %s1429
        // Predicated region
        $region85: #{tpu_custom_call.1} parent=63 // pred_check
          %p1431 = pneg %p317
        $region86: #{tpu_custom_call.1} parent=63 // pred_check_branch
          %1433 = sbr.rel (%p1431) target = $region88
        $region87: #{tpu_custom_call.1} parent=63 // pred_region
          %s1434 = smul.u32 2, %s38
          %s1436 = ssub.s32 256, 256
          %1437 = vsyncadd %s1427, %s1436
          %s1438 = smul.addr %s37, 2
          %s1439 = sadd.s32 %s1434, %s1438
          %s1440 = smul.addr %s1439, 128
          %s1441 = scalar_lea.hbm %s11, %s1440
          %s1442 = sshll.u32 %s1430, 4
          %s1443 = int_to_ptr.vmem [resolvable:$true] %s1442
          %1448 = dma.vmem_to_hbm [thread:$0]  %s1443, 256, %s1441, %s1427, 128, 128, 8
        $region88: #{tpu_custom_call.1} parent=63 // pred_fallthru
          _
      $region64: #{tpu_custom_call.1} parent=5 // pred_fallthru
        _
      %p1449 = scmp.le.s32.totalorder 2, %s28
      // Predicated region
      $region89: #{tpu_custom_call.1} parent=5 // pred_check
        %p1450 = pneg %p1449
      $region90: #{tpu_custom_call.1} parent=5 // pred_check_branch
        %1452 = sbr.rel (%p1450) target = $region92
      $region91: #{tpu_custom_call.1} parent=5 // pred_region
        %s1453 = ssub.s32 %s28, 2
        // Predicated region
        $region93: #{tpu_custom_call.1} parent=91 // pred_check
          %p1454 = pneg %p323
        $region94: #{tpu_custom_call.1} parent=91 // pred_check_branch
          %1456 = sbr.rel (%p1454) target = $region96
        $region95: #{tpu_custom_call.1} parent=91 // pred_region
          %s1457 = sand.u32 %s308, 1
          %s1458 = scalar_lea.sflag [#allocation4], %s1457
          %s1459 = sand.u32 %s308, 1
          %s1460 = smul.addr %s1459, 16
          %s1461 = scalar_lea.vmem [#allocation12], %s1460
          %1462 = dma.done %s1458, 256
        $region96: #{tpu_custom_call.1} parent=91 // pred_fallthru
          _
      $region92: #{tpu_custom_call.1} parent=5 // pred_fallthru
        _
    $region6: #{tpu_custom_call.1} parent=1 // loop_footer
      %s32 = sadd.s32 1, %s28
    $region7: #{tpu_custom_call.1} parent=1 // loop_footer_branch
      %27 = sbr.rel target = $region3
    $region8: #{tpu_custom_call.1} parent=1 // loop_exit
      _
    %1463 = vsyncpa [#allocation3], 1
    %s1464 = scalar_lea.sflag [#allocation3], 1
    %1465 = vsyncpa %s1464, 1
    %1466 = vsyncpa [#allocation8], 1
    %s1467 = scalar_lea.sflag [#allocation8], 1
    %1468 = vsyncpa %s1467, 1
    %1469 = vsyncpa [#allocation11], 1
    %1470 = vsyncpa [#allocation4], 1
    %s1471 = scalar_lea.sflag [#allocation4], 1
    %1472 = vsyncpa %s1471, 1
    %1473 = vsyncpa [#allocation5], 1
    %s1474 = scalar_lea.sflag [#allocation5], 1
    %1475 = vsyncpa %s1474, 1

</llo_original>
